<compile_context>
chip_gen: v7x
topology: tpu7x:2x2x1
jax: 0.10.0
libtpu: 0.0.40
codegen_flags: <defaults>
</compile_context>

<pallas_src>
from functools import partial

import jax
import jax.numpy as jnp
import numpy as np
from jax.experimental import pallas as pl
from jax.experimental.pallas import tpu as pltpu


# ---------------------------------------------------------------------------
# Kernel
#   x0, x1   : (C, N, HW) f32   (HW on lanes, N on sublanes, C = leading slabs)
#   c0, c1   : (N, C)     f32   center pixel, pre-scaled by 1/C
#   w        : (C*(C+1),) f32   in SMEM, row-major conv weight W[o, 0..C]
#   out      : (N, C)     f32   pooled0 + pooled1
#   num*/den*: (C, tn, 128) f32 VMEM lane-partial accumulators (per map)
# ---------------------------------------------------------------------------
def _attention_pool_kernel(x0_ref, x1_ref, c0_ref, c1_ref, w_ref, out_ref,
                           num0, den0, num1, den1,
                           *, C, HW, tn, thw, needs_mask):
    t = pl.program_id(1)  # HW-tile index (reduction axis, innermost)

    @pl.when(t == 0)
    def _init():
        num0[...] = jnp.zeros_like(num0)
        den0[...] = jnp.zeros_like(den0)
        num1[...] = jnp.zeros_like(num1)
        den1[...] = jnp.zeros_like(den1)

    if needs_mask:
        lane = jax.lax.broadcasted_iota(jnp.int32, (tn, thw), 1)
        valid = (t * thw + lane) < HW
    else:
        valid = None  # HW divides thw exactly: no tail, no mask ops emitted

    n_chunks = thw // 128

    def accumulate(x_ref, c_ref, num_acc, den_acc):
        # Zero-cost leading-dim channel views, each (tn, thw).
        xs = [x_ref[i] for i in range(C)]
        cen = c_ref[...]                              # (tn, C), already * 1/C

        # Normalized dot product with the center pixel (broadcast over lanes).
        dot = xs[0] * cen[:, 0:1]
        for i in range(1, C):
            dot = dot + xs[i] * cen[:, i:i + 1]

        for o in range(C):
            # 1x1 conv over [x ; dot] channels: scalar-broadcast FMAs (SMEM weights).
            pre = w_ref[o * (C + 1) + C] * dot
            for i in range(C):
                pre = pre + w_ref[o * (C + 1) + i] * xs[i]
            att = jax.nn.sigmoid(pre)                 # (tn, thw)
            prod = xs[o] * att
            if valid is not None:
                # Mask BOTH terms: sigmoid(garbage) != 0 and garbage*0 may be NaN.
                att = jnp.where(valid, att, 0.0)
                prod = jnp.where(valid, prod, 0.0)
            # Fold lanes in 128-wide chunks with VALU adds (static, layout-
            # preserving lane slices).  The 128->1 reduce is done in finalize.
            p_n = prod[:, 0:128]
            p_d = att[:, 0:128]
            for j in range(1, n_chunks):
                p_n = p_n + prod[:, j * 128:(j + 1) * 128]
                p_d = p_d + att[:, j * 128:(j + 1) * 128]
            num_acc[o] += p_n
            den_acc[o] += p_d

    accumulate(x0_ref, c0_ref, num0, den0)
    accumulate(x1_ref, c1_ref, num1, den1)

    @pl.when(t == pl.num_programs(1) - 1)
    def _finalize():
        for o in range(C):
            # Exact divide; epsilon on the accumulated denominator, matching
            # PyTorch's att / (att.sum(hw) + 1e-8).
            p0 = (jnp.sum(num0[o], axis=-1, keepdims=True) /
                  (jnp.sum(den0[o], axis=-1, keepdims=True) + 1e-8))
            p1 = (jnp.sum(num1[o], axis=-1, keepdims=True) /
                  (jnp.sum(den1[o], axis=-1, keepdims=True) + 1e-8))
            out_ref[:, o:o + 1] = p0 + p1             # caLayer weights == 1


def _pick_hw_tile(hw, cap=2048):
    """128-aligned HW tile, capped (bounded VMEM on every generation)."""
    cap = max(128, cap - cap % 128)
    return min(cap, ((hw + 127) // 128) * 128)


# ---------------------------------------------------------------------------
# Wrapper
# ---------------------------------------------------------------------------
def cpdfp_forward(inputs, conv_w, ca_w1, ca_b1, ca_w2, ca_b2):
    """inputs: list of exactly 2 (N, C, H, W) float32 arrays (the module's
    caLayer Conv1d(in_channels=2) fixes L=2).  Returns (N, C).

    ca_* parameters are accepted for interface parity but are mathematically
    inert in the original forward (softmax over a size-1 axis is exactly 1)."""
    del ca_w1, ca_b1, ca_w2, ca_b2  # inert: softmax(dim=1) over size-1 axis == 1
    assert len(inputs) == 2, "CPDFP's caLayer requires exactly 2 feature maps"

    N, C, H, W = inputs[0].shape
    HW = H * W

    # PyTorch conv weight (C, C+1, 1, 1) -> flat row-major (C*(C+1),) for SMEM.
    w_flat = conv_w.reshape(C * (C + 1)).astype(jnp.float32)

    tn = 8 if N % 8 == 0 else N                 # N-tile (sublane-friendly)
    thw = _pick_hw_tile(HW)                     # HW-tile (lane axis)
    n_hw = (HW + thw - 1) // thw
    needs_mask = (HW % thw) != 0

    def prep(feat):
        feat = feat.astype(jnp.float32)
        # Channel-leading (C, N, HW) so in-kernel channel slices are free views.
        x = jnp.transpose(feat, (1, 0, 2, 3)).reshape(C, N, HW)
        center = feat[:, :, H // 2, W // 2] * (1.0 / C)   # fold 1/C here
        return x, center

    x0, c0 = prep(inputs[0])
    x1, c1 = prep(inputs[1])

    x_spec = pl.BlockSpec((C, tn, thw), lambda n, t: (0, n, t))
    c_spec = pl.BlockSpec((tn, C), lambda n, t: (n, 0))

    return pl.pallas_call(
        partial(_attention_pool_kernel, C=C, HW=HW, tn=tn, thw=thw,
                needs_mask=needs_mask),
        out_shape=jax.ShapeDtypeStruct((N, C), jnp.float32),
        grid=(N // tn, n_hw),
        in_specs=[x_spec, x_spec, c_spec, c_spec,
                  pl.BlockSpec(memory_space=pltpu.MemorySpace.SMEM)],
        out_specs=pl.BlockSpec((tn, C), lambda n, t: (n, 0)),
        scratch_shapes=[pltpu.VMEM((C, tn, 128), jnp.float32)
                        for _ in range(4)],     # num0, den0, num1, den1
        compiler_params=pltpu.CompilerParams(
            dimension_semantics=("parallel", "arbitrary")),
    )(x0, x1, c0, c1, w_flat)


# ---------------------------------------------------------------------------
# Pure-JAX reference (mirrors the PyTorch forward exactly, incl. caLayer)
# ---------------------------------------------------------------------------
def cpdfp_reference(inputs, conv_w, ca_w1, ca_b1, ca_w2, ca_b2):
    outs = []
    for feat in inputs:
        b, c, h, w = feat.shape
        center = feat[:, :, h // 2, w // 2][:, :, None, None]
        dot = jnp.sum(feat * center, axis=1, keepdims=True) / c
        concat = jnp.concatenate([feat, dot], axis=1)               # (N, C+1, H, W)
        att = jax.nn.sigmoid(
            jnp.einsum("oi,nihw->nohw", conv_w.reshape(c, c + 1), concat)
        )
        norm = att / (jnp.sum(att, axis=(2, 3), keepdims=True) + 1e-8)
        outs.append(jnp.sum(feat * norm, axis=(2, 3)))               # (N, C)
    pooled = jnp.stack(outs, axis=1)                                 # (N, L, C)
    y1 = jax.nn.relu(
        jnp.einsum("ol,nlc->noc", ca_w1.reshape(4, 2), pooled) + ca_b1[None, :, None]
    )
    y2 = jnp.einsum("ko,noc->nkc", ca_w2.reshape(1, 4), y1) + ca_b2[None, :, None]
    xw = jax.nn.softmax(y2, axis=1)
    return jnp.sum(pooled * xw, axis=1)                              # (N, C)


if __name__ == "__main__":
    # Small deterministic shapes: L=2 feature maps (required by caLayer), N=2,
    # C=4 channels, 16x16 spatial.
    N, C, H, W = 2, 4, 16, 16

    key = jax.random.PRNGKey(0)
    k = jax.random.split(key, 8)

    feat0 = jax.random.normal(k[0], (N, C, H, W), jnp.float32)
    feat1 = jax.random.normal(k[1], (N, C, H, W), jnp.float32)
    inputs = [feat0, feat1]

    # Parameters (deterministic synthetic init, shapes from __init__):
    conv_w = jax.random.normal(k[2], (C, C + 1, 1, 1), jnp.float32) * 0.3
    ca_w1 = jax.random.normal(k[3], (2 * 2, 2, 1), jnp.float32) * 0.3   # Conv1d(2 -> 4)
    ca_b1 = jax.random.normal(k[4], (2 * 2,), jnp.float32) * 0.1
    ca_w2 = jax.random.normal(k[5], (1, 2 * 2, 1), jnp.float32) * 0.3   # Conv1d(4 -> 1)
    ca_b2 = jax.random.normal(k[6], (1,), jnp.float32) * 0.1

    fwd = jax.jit(cpdfp_forward)
    out = fwd(inputs, conv_w, ca_w1, ca_b1, ca_w2, ca_b2)
    out = jax.block_until_ready(out)

    ref = cpdfp_reference(inputs, conv_w, ca_w1, ca_b1, ca_w2, ca_b2)
    np.testing.assert_allclose(np.asarray(out), np.asarray(ref), rtol=1e-5, atol=1e-5)

    assert out.shape == (N, C)
    print("KERNEL_OK")
</pallas_src>

<mosaic_0001>
module attributes {stable_mosaic.version = 11 : i64} {
  func.func @_attention_pool_kernel(%arg0: i32, %arg1: i32, %arg2: memref<4x2x256xf32, #tpu.memory_space<vmem>>, %arg3: memref<4x2x256xf32, #tpu.memory_space<vmem>>, %arg4: memref<2x4xf32, #tpu.memory_space<vmem>>, %arg5: memref<2x4xf32, #tpu.memory_space<vmem>>, %arg6: memref<20xf32, #tpu.memory_space<smem>>, %arg7: memref<2x4xf32, #tpu.memory_space<vmem>>, %arg8: memref<4x2x128xf32, #tpu.memory_space<vmem>>, %arg9: memref<4x2x128xf32, #tpu.memory_space<vmem>>, %arg10: memref<4x2x128xf32, #tpu.memory_space<vmem>>, %arg11: memref<4x2x128xf32, #tpu.memory_space<vmem>>) attributes {dimension_semantics = [#tpu.dimension_semantics<parallel>, #tpu.dimension_semantics<arbitrary>], iteration_bounds = array<i64: 1, 1>, scalar_prefetch = 0 : i64, scratch_operands = 4 : i64, tpu.core_type = #tpu.core_type<tc>, window_params = [{transform_indices = @transform_0, window_bounds = array<i64: 4, 2, 256>}, {transform_indices = @transform_1, window_bounds = array<i64: 4, 2, 256>}, {transform_indices = @transform_2, window_bounds = array<i64: 2, 4>}, {transform_indices = @transform_3, window_bounds = array<i64: 2, 4>}, {transform_indices = @transform_4, window_bounds = array<i64: 20>}, {transform_indices = @transform_5, window_bounds = array<i64: 2, 4>}]} {
    %c0_i32 = arith.constant 0 : i32
    %0 = arith.cmpi eq, %arg1, %c0_i32 : i32
    %1 = arith.extui %0 : i1 to i32
    %c0_i32_0 = arith.constant 0 : i32
    %2 = arith.cmpi ne, %1, %c0_i32_0 : i32
    scf.if %2 {
      %cst_154 = arith.constant 0.000000e+00 : f32
      %398 = vector.broadcast %cst_154 : f32 to vector<4x2x128xf32>
      %c0_155 = arith.constant 0 : index
      %c0_156 = arith.constant 0 : index
      %c0_157 = arith.constant 0 : index
      %399 = vector.load %arg8[%c0_155, %c0_156, %c0_157] : memref<4x2x128xf32, #tpu.memory_space<vmem>>, vector<4x2x128xf32>
      tpu.vector_store %arg8[%c0_155, %c0_156, %c0_157], %398 {strides = array<i32>} : memref<4x2x128xf32, #tpu.memory_space<vmem>>, vector<4x2x128xf32>,
      %cst_158 = arith.constant 0.000000e+00 : f32
      %400 = vector.broadcast %cst_158 : f32 to vector<4x2x128xf32>
      %c0_159 = arith.constant 0 : index
      %c0_160 = arith.constant 0 : index
      %c0_161 = arith.constant 0 : index
      %401 = vector.load %arg9[%c0_159, %c0_160, %c0_161] : memref<4x2x128xf32, #tpu.memory_space<vmem>>, vector<4x2x128xf32>
      tpu.vector_store %arg9[%c0_159, %c0_160, %c0_161], %400 {strides = array<i32>} : memref<4x2x128xf32, #tpu.memory_space<vmem>>, vector<4x2x128xf32>,
      %cst_162 = arith.constant 0.000000e+00 : f32
      %402 = vector.broadcast %cst_162 : f32 to vector<4x2x128xf32>
      %c0_163 = arith.constant 0 : index
      %c0_164 = arith.constant 0 : index
      %c0_165 = arith.constant 0 : index
      %403 = vector.load %arg10[%c0_163, %c0_164, %c0_165] : memref<4x2x128xf32, #tpu.memory_space<vmem>>, vector<4x2x128xf32>
      tpu.vector_store %arg10[%c0_163, %c0_164, %c0_165], %402 {strides = array<i32>} : memref<4x2x128xf32, #tpu.memory_space<vmem>>, vector<4x2x128xf32>,
      %cst_166 = arith.constant 0.000000e+00 : f32
      %404 = vector.broadcast %cst_166 : f32 to vector<4x2x128xf32>
      %c0_167 = arith.constant 0 : index
      %c0_168 = arith.constant 0 : index
      %c0_169 = arith.constant 0 : index
      %405 = vector.load %arg11[%c0_167, %c0_168, %c0_169] : memref<4x2x128xf32, #tpu.memory_space<vmem>>, vector<4x2x128xf32>
      tpu.vector_store %arg11[%c0_167, %c0_168, %c0_169], %404 {strides = array<i32>} : memref<4x2x128xf32, #tpu.memory_space<vmem>>, vector<4x2x128xf32>,
    } else {
    }
    %c0 = arith.constant 0 : index
    %c0_1 = arith.constant 0 : index
    %c0_2 = arith.constant 0 : index
    %3 = vector.load %arg2[%c0, %c0_1, %c0_2] : memref<4x2x256xf32, #tpu.memory_space<vmem>>, vector<1x2x256xf32>
    %4 = vector.shape_cast %3 : vector<1x2x256xf32> to vector<2x256xf32>
    %c1 = arith.constant 1 : index
    %c0_3 = arith.constant 0 : index
    %c0_4 = arith.constant 0 : index
    %5 = vector.load %arg2[%c1, %c0_3, %c0_4] : memref<4x2x256xf32, #tpu.memory_space<vmem>>, vector<1x2x256xf32>
    %6 = vector.shape_cast %5 : vector<1x2x256xf32> to vector<2x256xf32>
    %c2 = arith.constant 2 : index
    %c0_5 = arith.constant 0 : index
    %c0_6 = arith.constant 0 : index
    %7 = vector.load %arg2[%c2, %c0_5, %c0_6] : memref<4x2x256xf32, #tpu.memory_space<vmem>>, vector<1x2x256xf32>
    %8 = vector.shape_cast %7 : vector<1x2x256xf32> to vector<2x256xf32>
    %c3 = arith.constant 3 : index
    %c0_7 = arith.constant 0 : index
    %c0_8 = arith.constant 0 : index
    %9 = vector.load %arg2[%c3, %c0_7, %c0_8] : memref<4x2x256xf32, #tpu.memory_space<vmem>>, vector<1x2x256xf32>
    %10 = vector.shape_cast %9 : vector<1x2x256xf32> to vector<2x256xf32>
    %c0_9 = arith.constant 0 : index
    %c0_10 = arith.constant 0 : index
    %11 = vector.load %arg4[%c0_9, %c0_10] : memref<2x4xf32, #tpu.memory_space<vmem>>, vector<2x4xf32>
    %12 = vector.extract_strided_slice %11 {offsets = [0, 0], sizes = [2, 1], strides = [1, 1]} : vector<2x4xf32> to vector<2x1xf32>
    %13 = vector.broadcast %12 : vector<2x1xf32> to vector<2x256xf32>
    %14 = arith.mulf %4, %13 : vector<2x256xf32>
    %15 = vector.extract_strided_slice %11 {offsets = [0, 1], sizes = [2, 1], strides = [1, 1]} : vector<2x4xf32> to vector<2x1xf32>
    %16 = vector.broadcast %15 : vector<2x1xf32> to vector<2x256xf32>
    %17 = arith.mulf %6, %16 : vector<2x256xf32>
    %18 = arith.addf %14, %17 : vector<2x256xf32>
    %19 = vector.extract_strided_slice %11 {offsets = [0, 2], sizes = [2, 1], strides = [1, 1]} : vector<2x4xf32> to vector<2x1xf32>
    %20 = vector.broadcast %19 : vector<2x1xf32> to vector<2x256xf32>
    %21 = arith.mulf %8, %20 : vector<2x256xf32>
    %22 = arith.addf %18, %21 : vector<2x256xf32>
    %23 = vector.extract_strided_slice %11 {offsets = [0, 3], sizes = [2, 1], strides = [1, 1]} : vector<2x4xf32> to vector<2x1xf32>
    %24 = vector.broadcast %23 : vector<2x1xf32> to vector<2x256xf32>
    %25 = arith.mulf %10, %24 : vector<2x256xf32>
    %26 = arith.addf %22, %25 : vector<2x256xf32>
    %c4 = arith.constant 4 : index
    %27 = memref.load %arg6[%c4] : memref<20xf32, #tpu.memory_space<smem>>
    %28 = vector.broadcast %27 : f32 to vector<2x256xf32>
    %29 = arith.mulf %28, %26 : vector<2x256xf32>
    %c0_11 = arith.constant 0 : index
    %30 = memref.load %arg6[%c0_11] : memref<20xf32, #tpu.memory_space<smem>>
    %31 = vector.broadcast %30 : f32 to vector<2x256xf32>
    %32 = arith.mulf %31, %4 : vector<2x256xf32>
    %33 = arith.addf %29, %32 : vector<2x256xf32>
    %c1_12 = arith.constant 1 : index
    %34 = memref.load %arg6[%c1_12] : memref<20xf32, #tpu.memory_space<smem>>
    %35 = vector.broadcast %34 : f32 to vector<2x256xf32>
    %36 = arith.mulf %35, %6 : vector<2x256xf32>
    %37 = arith.addf %33, %36 : vector<2x256xf32>
    %c2_13 = arith.constant 2 : index
    %38 = memref.load %arg6[%c2_13] : memref<20xf32, #tpu.memory_space<smem>>
    %39 = vector.broadcast %38 : f32 to vector<2x256xf32>
    %40 = arith.mulf %39, %8 : vector<2x256xf32>
    %41 = arith.addf %37, %40 : vector<2x256xf32>
    %c3_14 = arith.constant 3 : index
    %42 = memref.load %arg6[%c3_14] : memref<20xf32, #tpu.memory_space<smem>>
    %43 = vector.broadcast %42 : f32 to vector<2x256xf32>
    %44 = arith.mulf %43, %10 : vector<2x256xf32>
    %45 = arith.addf %41, %44 : vector<2x256xf32>
    %46 = arith.negf %45 : vector<2x256xf32>
    %47 = math.exp %46 : vector<2x256xf32>
    %cst = arith.constant 1.000000e+00 : f32
    %48 = vector.broadcast %cst : f32 to vector<2x256xf32>
    %49 = arith.addf %48, %47 : vector<2x256xf32>
    %50 = arith.divf %48, %49 : vector<2x256xf32>
    %51 = arith.mulf %4, %50 : vector<2x256xf32>
    %52 = vector.extract_strided_slice %51 {offsets = [0, 0], sizes = [2, 128], strides = [1, 1]} : vector<2x256xf32> to vector<2x128xf32>
    %53 = vector.extract_strided_slice %50 {offsets = [0, 0], sizes = [2, 128], strides = [1, 1]} : vector<2x256xf32> to vector<2x128xf32>
    %54 = vector.extract_strided_slice %51 {offsets = [0, 128], sizes = [2, 128], strides = [1, 1]} : vector<2x256xf32> to vector<2x128xf32>
    %55 = arith.addf %52, %54 : vector<2x128xf32>
    %56 = vector.extract_strided_slice %50 {offsets = [0, 128], sizes = [2, 128], strides = [1, 1]} : vector<2x256xf32> to vector<2x128xf32>
    %57 = arith.addf %53, %56 : vector<2x128xf32>
    %c0_15 = arith.constant 0 : index
    %c0_16 = arith.constant 0 : index
    %c0_17 = arith.constant 0 : index
    %58 = vector.load %arg8[%c0_15, %c0_16, %c0_17] : memref<4x2x128xf32, #tpu.memory_space<vmem>>, vector<1x2x128xf32>
    %59 = vector.shape_cast %58 : vector<1x2x128xf32> to vector<2x128xf32>
    %60 = arith.addf %59, %55 : vector<2x128xf32>
    %c0_18 = arith.constant 0 : index
    %c0_19 = arith.constant 0 : index
    %c0_20 = arith.constant 0 : index
    %61 = vector.load %arg8[%c0_18, %c0_19, %c0_20] : memref<4x2x128xf32, #tpu.memory_space<vmem>>, vector<1x2x128xf32>
    %62 = vector.shape_cast %61 : vector<1x2x128xf32> to vector<2x128xf32>
    %63 = vector.shape_cast %60 : vector<2x128xf32> to vector<1x2x128xf32>
    tpu.vector_store %arg8[%c0_18, %c0_19, %c0_20], %63 {strides = array<i32>} : memref<4x2x128xf32, #tpu.memory_space<vmem>>, vector<1x2x128xf32>,
    %c0_21 = arith.constant 0 : index
    %c0_22 = arith.constant 0 : index
    %c0_23 = arith.constant 0 : index
    %64 = vector.load %arg9[%c0_21, %c0_22, %c0_23] : memref<4x2x128xf32, #tpu.memory_space<vmem>>, vector<1x2x128xf32>
    %65 = vector.shape_cast %64 : vector<1x2x128xf32> to vector<2x128xf32>
    %66 = arith.addf %65, %57 : vector<2x128xf32>
    %c0_24 = arith.constant 0 : index
    %c0_25 = arith.constant 0 : index
    %c0_26 = arith.constant 0 : index
    %67 = vector.load %arg9[%c0_24, %c0_25, %c0_26] : memref<4x2x128xf32, #tpu.memory_space<vmem>>, vector<1x2x128xf32>
    %68 = vector.shape_cast %67 : vector<1x2x128xf32> to vector<2x128xf32>
    %69 = vector.shape_cast %66 : vector<2x128xf32> to vector<1x2x128xf32>
    tpu.vector_store %arg9[%c0_24, %c0_25, %c0_26], %69 {strides = array<i32>} : memref<4x2x128xf32, #tpu.memory_space<vmem>>, vector<1x2x128xf32>,
    %c9 = arith.constant 9 : index
    %70 = memref.load %arg6[%c9] : memref<20xf32, #tpu.memory_space<smem>>
    %71 = vector.broadcast %70 : f32 to vector<2x256xf32>
    %72 = arith.mulf %71, %26 : vector<2x256xf32>
    %c5 = arith.constant 5 : index
    %73 = memref.load %arg6[%c5] : memref<20xf32, #tpu.memory_space<smem>>
    %74 = vector.broadcast %73 : f32 to vector<2x256xf32>
    %75 = arith.mulf %74, %4 : vector<2x256xf32>
    %76 = arith.addf %72, %75 : vector<2x256xf32>
    %c6 = arith.constant 6 : index
    %77 = memref.load %arg6[%c6] : memref<20xf32, #tpu.memory_space<smem>>
    %78 = vector.broadcast %77 : f32 to vector<2x256xf32>
    %79 = arith.mulf %78, %6 : vector<2x256xf32>
    %80 = arith.addf %76, %79 : vector<2x256xf32>
    %c7 = arith.constant 7 : index
    %81 = memref.load %arg6[%c7] : memref<20xf32, #tpu.memory_space<smem>>
    %82 = vector.broadcast %81 : f32 to vector<2x256xf32>
    %83 = arith.mulf %82, %8 : vector<2x256xf32>
    %84 = arith.addf %80, %83 : vector<2x256xf32>
    %c8 = arith.constant 8 : index
    %85 = memref.load %arg6[%c8] : memref<20xf32, #tpu.memory_space<smem>>
    %86 = vector.broadcast %85 : f32 to vector<2x256xf32>
    %87 = arith.mulf %86, %10 : vector<2x256xf32>
    %88 = arith.addf %84, %87 : vector<2x256xf32>
    %89 = arith.negf %88 : vector<2x256xf32>
    %90 = math.exp %89 : vector<2x256xf32>
    %cst_27 = arith.constant 1.000000e+00 : f32
    %91 = vector.broadcast %cst_27 : f32 to vector<2x256xf32>
    %92 = arith.addf %91, %90 : vector<2x256xf32>
    %93 = arith.divf %91, %92 : vector<2x256xf32>
    %94 = arith.mulf %6, %93 : vector<2x256xf32>
    %95 = vector.extract_strided_slice %94 {offsets = [0, 0], sizes = [2, 128], strides = [1, 1]} : vector<2x256xf32> to vector<2x128xf32>
    %96 = vector.extract_strided_slice %93 {offsets = [0, 0], sizes = [2, 128], strides = [1, 1]} : vector<2x256xf32> to vector<2x128xf32>
    %97 = vector.extract_strided_slice %94 {offsets = [0, 128], sizes = [2, 128], strides = [1, 1]} : vector<2x256xf32> to vector<2x128xf32>
    %98 = arith.addf %95, %97 : vector<2x128xf32>
    %99 = vector.extract_strided_slice %93 {offsets = [0, 128], sizes = [2, 128], strides = [1, 1]} : vector<2x256xf32> to vector<2x128xf32>
    %100 = arith.addf %96, %99 : vector<2x128xf32>
    %c1_28 = arith.constant 1 : index
    %c0_29 = arith.constant 0 : index
    %c0_30 = arith.constant 0 : index
    %101 = vector.load %arg8[%c1_28, %c0_29, %c0_30] : memref<4x2x128xf32, #tpu.memory_space<vmem>>, vector<1x2x128xf32>
    %102 = vector.shape_cast %101 : vector<1x2x128xf32> to vector<2x128xf32>
    %103 = arith.addf %102, %98 : vector<2x128xf32>
    %c1_31 = arith.constant 1 : index
    %c0_32 = arith.constant 0 : index
    %c0_33 = arith.constant 0 : index
    %104 = vector.load %arg8[%c1_31, %c0_32, %c0_33] : memref<4x2x128xf32, #tpu.memory_space<vmem>>, vector<1x2x128xf32>
    %105 = vector.shape_cast %104 : vector<1x2x128xf32> to vector<2x128xf32>
    %106 = vector.shape_cast %103 : vector<2x128xf32> to vector<1x2x128xf32>
    tpu.vector_store %arg8[%c1_31, %c0_32, %c0_33], %106 {strides = array<i32>} : memref<4x2x128xf32, #tpu.memory_space<vmem>>, vector<1x2x128xf32>,
    %c1_34 = arith.constant 1 : index
    %c0_35 = arith.constant 0 : index
    %c0_36 = arith.constant 0 : index
    %107 = vector.load %arg9[%c1_34, %c0_35, %c0_36] : memref<4x2x128xf32, #tpu.memory_space<vmem>>, vector<1x2x128xf32>
    %108 = vector.shape_cast %107 : vector<1x2x128xf32> to vector<2x128xf32>
    %109 = arith.addf %108, %100 : vector<2x128xf32>
    %c1_37 = arith.constant 1 : index
    %c0_38 = arith.constant 0 : index
    %c0_39 = arith.constant 0 : index
    %110 = vector.load %arg9[%c1_37, %c0_38, %c0_39] : memref<4x2x128xf32, #tpu.memory_space<vmem>>, vector<1x2x128xf32>
    %111 = vector.shape_cast %110 : vector<1x2x128xf32> to vector<2x128xf32>
    %112 = vector.shape_cast %109 : vector<2x128xf32> to vector<1x2x128xf32>
    tpu.vector_store %arg9[%c1_37, %c0_38, %c0_39], %112 {strides = array<i32>} : memref<4x2x128xf32, #tpu.memory_space<vmem>>, vector<1x2x128xf32>,
    %c14 = arith.constant 14 : index
    %113 = memref.load %arg6[%c14] : memref<20xf32, #tpu.memory_space<smem>>
    %114 = vector.broadcast %113 : f32 to vector<2x256xf32>
    %115 = arith.mulf %114, %26 : vector<2x256xf32>
    %c10 = arith.constant 10 : index
    %116 = memref.load %arg6[%c10] : memref<20xf32, #tpu.memory_space<smem>>
    %117 = vector.broadcast %116 : f32 to vector<2x256xf32>
    %118 = arith.mulf %117, %4 : vector<2x256xf32>
    %119 = arith.addf %115, %118 : vector<2x256xf32>
    %c11 = arith.constant 11 : index
    %120 = memref.load %arg6[%c11] : memref<20xf32, #tpu.memory_space<smem>>
    %121 = vector.broadcast %120 : f32 to vector<2x256xf32>
    %122 = arith.mulf %121, %6 : vector<2x256xf32>
    %123 = arith.addf %119, %122 : vector<2x256xf32>
    %c12 = arith.constant 12 : index
    %124 = memref.load %arg6[%c12] : memref<20xf32, #tpu.memory_space<smem>>
    %125 = vector.broadcast %124 : f32 to vector<2x256xf32>
    %126 = arith.mulf %125, %8 : vector<2x256xf32>
    %127 = arith.addf %123, %126 : vector<2x256xf32>
    %c13 = arith.constant 13 : index
    %128 = memref.load %arg6[%c13] : memref<20xf32, #tpu.memory_space<smem>>
    %129 = vector.broadcast %128 : f32 to vector<2x256xf32>
    %130 = arith.mulf %129, %10 : vector<2x256xf32>
    %131 = arith.addf %127, %130 : vector<2x256xf32>
    %132 = arith.negf %131 : vector<2x256xf32>
    %133 = math.exp %132 : vector<2x256xf32>
    %cst_40 = arith.constant 1.000000e+00 : f32
    %134 = vector.broadcast %cst_40 : f32 to vector<2x256xf32>
    %135 = arith.addf %134, %133 : vector<2x256xf32>
    %136 = arith.divf %134, %135 : vector<2x256xf32>
    %137 = arith.mulf %8, %136 : vector<2x256xf32>
    %138 = vector.extract_strided_slice %137 {offsets = [0, 0], sizes = [2, 128], strides = [1, 1]} : vector<2x256xf32> to vector<2x128xf32>
    %139 = vector.extract_strided_slice %136 {offsets = [0, 0], sizes = [2, 128], strides = [1, 1]} : vector<2x256xf32> to vector<2x128xf32>
    %140 = vector.extract_strided_slice %137 {offsets = [0, 128], sizes = [2, 128], strides = [1, 1]} : vector<2x256xf32> to vector<2x128xf32>
    %141 = arith.addf %138, %140 : vector<2x128xf32>
    %142 = vector.extract_strided_slice %136 {offsets = [0, 128], sizes = [2, 128], strides = [1, 1]} : vector<2x256xf32> to vector<2x128xf32>
    %143 = arith.addf %139, %142 : vector<2x128xf32>
    %c2_41 = arith.constant 2 : index
    %c0_42 = arith.constant 0 : index
    %c0_43 = arith.constant 0 : index
    %144 = vector.load %arg8[%c2_41, %c0_42, %c0_43] : memref<4x2x128xf32, #tpu.memory_space<vmem>>, vector<1x2x128xf32>
    %145 = vector.shape_cast %144 : vector<1x2x128xf32> to vector<2x128xf32>
    %146 = arith.addf %145, %141 : vector<2x128xf32>
    %c2_44 = arith.constant 2 : index
    %c0_45 = arith.constant 0 : index
    %c0_46 = arith.constant 0 : index
    %147 = vector.load %arg8[%c2_44, %c0_45, %c0_46] : memref<4x2x128xf32, #tpu.memory_space<vmem>>, vector<1x2x128xf32>
    %148 = vector.shape_cast %147 : vector<1x2x128xf32> to vector<2x128xf32>
    %149 = vector.shape_cast %146 : vector<2x128xf32> to vector<1x2x128xf32>
    tpu.vector_store %arg8[%c2_44, %c0_45, %c0_46], %149 {strides = array<i32>} : memref<4x2x128xf32, #tpu.memory_space<vmem>>, vector<1x2x128xf32>,
    %c2_47 = arith.constant 2 : index
    %c0_48 = arith.constant 0 : index
    %c0_49 = arith.constant 0 : index
    %150 = vector.load %arg9[%c2_47, %c0_48, %c0_49] : memref<4x2x128xf32, #tpu.memory_space<vmem>>, vector<1x2x128xf32>
    %151 = vector.shape_cast %150 : vector<1x2x128xf32> to vector<2x128xf32>
    %152 = arith.addf %151, %143 : vector<2x128xf32>
    %c2_50 = arith.constant 2 : index
    %c0_51 = arith.constant 0 : index
    %c0_52 = arith.constant 0 : index
    %153 = vector.load %arg9[%c2_50, %c0_51, %c0_52] : memref<4x2x128xf32, #tpu.memory_space<vmem>>, vector<1x2x128xf32>
    %154 = vector.shape_cast %153 : vector<1x2x128xf32> to vector<2x128xf32>
    %155 = vector.shape_cast %152 : vector<2x128xf32> to vector<1x2x128xf32>
    tpu.vector_store %arg9[%c2_50, %c0_51, %c0_52], %155 {strides = array<i32>} : memref<4x2x128xf32, #tpu.memory_space<vmem>>, vector<1x2x128xf32>,
    %c19 = arith.constant 19 : index
    %156 = memref.load %arg6[%c19] : memref<20xf32, #tpu.memory_space<smem>>
    %157 = vector.broadcast %156 : f32 to vector<2x256xf32>
    %158 = arith.mulf %157, %26 : vector<2x256xf32>
    %c15 = arith.constant 15 : index
    %159 = memref.load %arg6[%c15] : memref<20xf32, #tpu.memory_space<smem>>
    %160 = vector.broadcast %159 : f32 to vector<2x256xf32>
    %161 = arith.mulf %160, %4 : vector<2x256xf32>
    %162 = arith.addf %158, %161 : vector<2x256xf32>
    %c16 = arith.constant 16 : index
    %163 = memref.load %arg6[%c16] : memref<20xf32, #tpu.memory_space<smem>>
    %164 = vector.broadcast %163 : f32 to vector<2x256xf32>
    %165 = arith.mulf %164, %6 : vector<2x256xf32>
    %166 = arith.addf %162, %165 : vector<2x256xf32>
    %c17 = arith.constant 17 : index
    %167 = memref.load %arg6[%c17] : memref<20xf32, #tpu.memory_space<smem>>
    %168 = vector.broadcast %167 : f32 to vector<2x256xf32>
    %169 = arith.mulf %168, %8 : vector<2x256xf32>
    %170 = arith.addf %166, %169 : vector<2x256xf32>
    %c18 = arith.constant 18 : index
    %171 = memref.load %arg6[%c18] : memref<20xf32, #tpu.memory_space<smem>>
    %172 = vector.broadcast %171 : f32 to vector<2x256xf32>
    %173 = arith.mulf %172, %10 : vector<2x256xf32>
    %174 = arith.addf %170, %173 : vector<2x256xf32>
    %175 = arith.negf %174 : vector<2x256xf32>
    %176 = math.exp %175 : vector<2x256xf32>
    %cst_53 = arith.constant 1.000000e+00 : f32
    %177 = vector.broadcast %cst_53 : f32 to vector<2x256xf32>
    %178 = arith.addf %177, %176 : vector<2x256xf32>
    %179 = arith.divf %177, %178 : vector<2x256xf32>
    %180 = arith.mulf %10, %179 : vector<2x256xf32>
    %181 = vector.extract_strided_slice %180 {offsets = [0, 0], sizes = [2, 128], strides = [1, 1]} : vector<2x256xf32> to vector<2x128xf32>
    %182 = vector.extract_strided_slice %179 {offsets = [0, 0], sizes = [2, 128], strides = [1, 1]} : vector<2x256xf32> to vector<2x128xf32>
    %183 = vector.extract_strided_slice %180 {offsets = [0, 128], sizes = [2, 128], strides = [1, 1]} : vector<2x256xf32> to vector<2x128xf32>
    %184 = arith.addf %181, %183 : vector<2x128xf32>
    %185 = vector.extract_strided_slice %179 {offsets = [0, 128], sizes = [2, 128], strides = [1, 1]} : vector<2x256xf32> to vector<2x128xf32>
    %186 = arith.addf %182, %185 : vector<2x128xf32>
    %c3_54 = arith.constant 3 : index
    %c0_55 = arith.constant 0 : index
    %c0_56 = arith.constant 0 : index
    %187 = vector.load %arg8[%c3_54, %c0_55, %c0_56] : memref<4x2x128xf32, #tpu.memory_space<vmem>>, vector<1x2x128xf32>
    %188 = vector.shape_cast %187 : vector<1x2x128xf32> to vector<2x128xf32>
    %189 = arith.addf %188, %184 : vector<2x128xf32>
    %c3_57 = arith.constant 3 : index
    %c0_58 = arith.constant 0 : index
    %c0_59 = arith.constant 0 : index
    %190 = vector.load %arg8[%c3_57, %c0_58, %c0_59] : memref<4x2x128xf32, #tpu.memory_space<vmem>>, vector<1x2x128xf32>
    %191 = vector.shape_cast %190 : vector<1x2x128xf32> to vector<2x128xf32>
    %192 = vector.shape_cast %189 : vector<2x128xf32> to vector<1x2x128xf32>
    tpu.vector_store %arg8[%c3_57, %c0_58, %c0_59], %192 {strides = array<i32>} : memref<4x2x128xf32, #tpu.memory_space<vmem>>, vector<1x2x128xf32>,
    %c3_60 = arith.constant 3 : index
    %c0_61 = arith.constant 0 : index
    %c0_62 = arith.constant 0 : index
    %193 = vector.load %arg9[%c3_60, %c0_61, %c0_62] : memref<4x2x128xf32, #tpu.memory_space<vmem>>, vector<1x2x128xf32>
    %194 = vector.shape_cast %193 : vector<1x2x128xf32> to vector<2x128xf32>
    %195 = arith.addf %194, %186 : vector<2x128xf32>
    %c3_63 = arith.constant 3 : index
    %c0_64 = arith.constant 0 : index
    %c0_65 = arith.constant 0 : index
    %196 = vector.load %arg9[%c3_63, %c0_64, %c0_65] : memref<4x2x128xf32, #tpu.memory_space<vmem>>, vector<1x2x128xf32>
    %197 = vector.shape_cast %196 : vector<1x2x128xf32> to vector<2x128xf32>
    %198 = vector.shape_cast %195 : vector<2x128xf32> to vector<1x2x128xf32>
    tpu.vector_store %arg9[%c3_63, %c0_64, %c0_65], %198 {strides = array<i32>} : memref<4x2x128xf32, #tpu.memory_space<vmem>>, vector<1x2x128xf32>,
    %c0_66 = arith.constant 0 : index
    %c0_67 = arith.constant 0 : index
    %c0_68 = arith.constant 0 : index
    %199 = vector.load %arg3[%c0_66, %c0_67, %c0_68] : memref<4x2x256xf32, #tpu.memory_space<vmem>>, vector<1x2x256xf32>
    %200 = vector.shape_cast %199 : vector<1x2x256xf32> to vector<2x256xf32>
    %c1_69 = arith.constant 1 : index
    %c0_70 = arith.constant 0 : index
    %c0_71 = arith.constant 0 : index
    %201 = vector.load %arg3[%c1_69, %c0_70, %c0_71] : memref<4x2x256xf32, #tpu.memory_space<vmem>>, vector<1x2x256xf32>
    %202 = vector.shape_cast %201 : vector<1x2x256xf32> to vector<2x256xf32>
    %c2_72 = arith.constant 2 : index
    %c0_73 = arith.constant 0 : index
    %c0_74 = arith.constant 0 : index
    %203 = vector.load %arg3[%c2_72, %c0_73, %c0_74] : memref<4x2x256xf32, #tpu.memory_space<vmem>>, vector<1x2x256xf32>
    %204 = vector.shape_cast %203 : vector<1x2x256xf32> to vector<2x256xf32>
    %c3_75 = arith.constant 3 : index
    %c0_76 = arith.constant 0 : index
    %c0_77 = arith.constant 0 : index
    %205 = vector.load %arg3[%c3_75, %c0_76, %c0_77] : memref<4x2x256xf32, #tpu.memory_space<vmem>>, vector<1x2x256xf32>
    %206 = vector.shape_cast %205 : vector<1x2x256xf32> to vector<2x256xf32>
    %c0_78 = arith.constant 0 : index
    %c0_79 = arith.constant 0 : index
    %207 = vector.load %arg5[%c0_78, %c0_79] : memref<2x4xf32, #tpu.memory_space<vmem>>, vector<2x4xf32>
    %208 = vector.extract_strided_slice %207 {offsets = [0, 0], sizes = [2, 1], strides = [1, 1]} : vector<2x4xf32> to vector<2x1xf32>
    %209 = vector.broadcast %208 : vector<2x1xf32> to vector<2x256xf32>
    %210 = arith.mulf %200, %209 : vector<2x256xf32>
    %211 = vector.extract_strided_slice %207 {offsets = [0, 1], sizes = [2, 1], strides = [1, 1]} : vector<2x4xf32> to vector<2x1xf32>
    %212 = vector.broadcast %211 : vector<2x1xf32> to vector<2x256xf32>
    %213 = arith.mulf %202, %212 : vector<2x256xf32>
    %214 = arith.addf %210, %213 : vector<2x256xf32>
    %215 = vector.extract_strided_slice %207 {offsets = [0, 2], sizes = [2, 1], strides = [1, 1]} : vector<2x4xf32> to vector<2x1xf32>
    %216 = vector.broadcast %215 : vector<2x1xf32> to vector<2x256xf32>
    %217 = arith.mulf %204, %216 : vector<2x256xf32>
    %218 = arith.addf %214, %217 : vector<2x256xf32>
    %219 = vector.extract_strided_slice %207 {offsets = [0, 3], sizes = [2, 1], strides = [1, 1]} : vector<2x4xf32> to vector<2x1xf32>
    %220 = vector.broadcast %219 : vector<2x1xf32> to vector<2x256xf32>
    %221 = arith.mulf %206, %220 : vector<2x256xf32>
    %222 = arith.addf %218, %221 : vector<2x256xf32>
    %c4_80 = arith.constant 4 : index
    %223 = memref.load %arg6[%c4_80] : memref<20xf32, #tpu.memory_space<smem>>
    %224 = vector.broadcast %223 : f32 to vector<2x256xf32>
    %225 = arith.mulf %224, %222 : vector<2x256xf32>
    %c0_81 = arith.constant 0 : index
    %226 = memref.load %arg6[%c0_81] : memref<20xf32, #tpu.memory_space<smem>>
    %227 = vector.broadcast %226 : f32 to vector<2x256xf32>
    %228 = arith.mulf %227, %200 : vector<2x256xf32>
    %229 = arith.addf %225, %228 : vector<2x256xf32>
    %c1_82 = arith.constant 1 : index
    %230 = memref.load %arg6[%c1_82] : memref<20xf32, #tpu.memory_space<smem>>
    %231 = vector.broadcast %230 : f32 to vector<2x256xf32>
    %232 = arith.mulf %231, %202 : vector<2x256xf32>
    %233 = arith.addf %229, %232 : vector<2x256xf32>
    %c2_83 = arith.constant 2 : index
    %234 = memref.load %arg6[%c2_83] : memref<20xf32, #tpu.memory_space<smem>>
    %235 = vector.broadcast %234 : f32 to vector<2x256xf32>
    %236 = arith.mulf %235, %204 : vector<2x256xf32>
    %237 = arith.addf %233, %236 : vector<2x256xf32>
    %c3_84 = arith.constant 3 : index
    %238 = memref.load %arg6[%c3_84] : memref<20xf32, #tpu.memory_space<smem>>
    %239 = vector.broadcast %238 : f32 to vector<2x256xf32>
    %240 = arith.mulf %239, %206 : vector<2x256xf32>
    %241 = arith.addf %237, %240 : vector<2x256xf32>
    %242 = arith.negf %241 : vector<2x256xf32>
    %243 = math.exp %242 : vector<2x256xf32>
    %cst_85 = arith.constant 1.000000e+00 : f32
    %244 = vector.broadcast %cst_85 : f32 to vector<2x256xf32>
    %245 = arith.addf %244, %243 : vector<2x256xf32>
    %246 = arith.divf %244, %245 : vector<2x256xf32>
    %247 = arith.mulf %200, %246 : vector<2x256xf32>
    %248 = vector.extract_strided_slice %247 {offsets = [0, 0], sizes = [2, 128], strides = [1, 1]} : vector<2x256xf32> to vector<2x128xf32>
    %249 = vector.extract_strided_slice %246 {offsets = [0, 0], sizes = [2, 128], strides = [1, 1]} : vector<2x256xf32> to vector<2x128xf32>
    %250 = vector.extract_strided_slice %247 {offsets = [0, 128], sizes = [2, 128], strides = [1, 1]} : vector<2x256xf32> to vector<2x128xf32>
    %251 = arith.addf %248, %250 : vector<2x128xf32>
    %252 = vector.extract_strided_slice %246 {offsets = [0, 128], sizes = [2, 128], strides = [1, 1]} : vector<2x256xf32> to vector<2x128xf32>
    %253 = arith.addf %249, %252 : vector<2x128xf32>
    %c0_86 = arith.constant 0 : index
    %c0_87 = arith.constant 0 : index
    %c0_88 = arith.constant 0 : index
    %254 = vector.load %arg10[%c0_86, %c0_87, %c0_88] : memref<4x2x128xf32, #tpu.memory_space<vmem>>, vector<1x2x128xf32>
    %255 = vector.shape_cast %254 : vector<1x2x128xf32> to vector<2x128xf32>
    %256 = arith.addf %255, %251 : vector<2x128xf32>
    %c0_89 = arith.constant 0 : index
    %c0_90 = arith.constant 0 : index
    %c0_91 = arith.constant 0 : index
    %257 = vector.load %arg10[%c0_89, %c0_90, %c0_91] : memref<4x2x128xf32, #tpu.memory_space<vmem>>, vector<1x2x128xf32>
    %258 = vector.shape_cast %257 : vector<1x2x128xf32> to vector<2x128xf32>
    %259 = vector.shape_cast %256 : vector<2x128xf32> to vector<1x2x128xf32>
    tpu.vector_store %arg10[%c0_89, %c0_90, %c0_91], %259 {strides = array<i32>} : memref<4x2x128xf32, #tpu.memory_space<vmem>>, vector<1x2x128xf32>,
    %c0_92 = arith.constant 0 : index
    %c0_93 = arith.constant 0 : index
    %c0_94 = arith.constant 0 : index
    %260 = vector.load %arg11[%c0_92, %c0_93, %c0_94] : memref<4x2x128xf32, #tpu.memory_space<vmem>>, vector<1x2x128xf32>
    %261 = vector.shape_cast %260 : vector<1x2x128xf32> to vector<2x128xf32>
    %262 = arith.addf %261, %253 : vector<2x128xf32>
    %c0_95 = arith.constant 0 : index
    %c0_96 = arith.constant 0 : index
    %c0_97 = arith.constant 0 : index
    %263 = vector.load %arg11[%c0_95, %c0_96, %c0_97] : memref<4x2x128xf32, #tpu.memory_space<vmem>>, vector<1x2x128xf32>
    %264 = vector.shape_cast %263 : vector<1x2x128xf32> to vector<2x128xf32>
    %265 = vector.shape_cast %262 : vector<2x128xf32> to vector<1x2x128xf32>
    tpu.vector_store %arg11[%c0_95, %c0_96, %c0_97], %265 {strides = array<i32>} : memref<4x2x128xf32, #tpu.memory_space<vmem>>, vector<1x2x128xf32>,
    %c9_98 = arith.constant 9 : index
    %266 = memref.load %arg6[%c9_98] : memref<20xf32, #tpu.memory_space<smem>>
    %267 = vector.broadcast %266 : f32 to vector<2x256xf32>
    %268 = arith.mulf %267, %222 : vector<2x256xf32>
    %c5_99 = arith.constant 5 : index
    %269 = memref.load %arg6[%c5_99] : memref<20xf32, #tpu.memory_space<smem>>
    %270 = vector.broadcast %269 : f32 to vector<2x256xf32>
    %271 = arith.mulf %270, %200 : vector<2x256xf32>
    %272 = arith.addf %268, %271 : vector<2x256xf32>
    %c6_100 = arith.constant 6 : index
    %273 = memref.load %arg6[%c6_100] : memref<20xf32, #tpu.memory_space<smem>>
    %274 = vector.broadcast %273 : f32 to vector<2x256xf32>
    %275 = arith.mulf %274, %202 : vector<2x256xf32>
    %276 = arith.addf %272, %275 : vector<2x256xf32>
    %c7_101 = arith.constant 7 : index
    %277 = memref.load %arg6[%c7_101] : memref<20xf32, #tpu.memory_space<smem>>
    %278 = vector.broadcast %277 : f32 to vector<2x256xf32>
    %279 = arith.mulf %278, %204 : vector<2x256xf32>
    %280 = arith.addf %276, %279 : vector<2x256xf32>
    %c8_102 = arith.constant 8 : index
    %281 = memref.load %arg6[%c8_102] : memref<20xf32, #tpu.memory_space<smem>>
    %282 = vector.broadcast %281 : f32 to vector<2x256xf32>
    %283 = arith.mulf %282, %206 : vector<2x256xf32>
    %284 = arith.addf %280, %283 : vector<2x256xf32>
    %285 = arith.negf %284 : vector<2x256xf32>
    %286 = math.exp %285 : vector<2x256xf32>
    %cst_103 = arith.constant 1.000000e+00 : f32
    %287 = vector.broadcast %cst_103 : f32 to vector<2x256xf32>
    %288 = arith.addf %287, %286 : vector<2x256xf32>
    %289 = arith.divf %287, %288 : vector<2x256xf32>
    %290 = arith.mulf %202, %289 : vector<2x256xf32>
    %291 = vector.extract_strided_slice %290 {offsets = [0, 0], sizes = [2, 128], strides = [1, 1]} : vector<2x256xf32> to vector<2x128xf32>
    %292 = vector.extract_strided_slice %289 {offsets = [0, 0], sizes = [2, 128], strides = [1, 1]} : vector<2x256xf32> to vector<2x128xf32>
    %293 = vector.extract_strided_slice %290 {offsets = [0, 128], sizes = [2, 128], strides = [1, 1]} : vector<2x256xf32> to vector<2x128xf32>
    %294 = arith.addf %291, %293 : vector<2x128xf32>
    %295 = vector.extract_strided_slice %289 {offsets = [0, 128], sizes = [2, 128], strides = [1, 1]} : vector<2x256xf32> to vector<2x128xf32>
    %296 = arith.addf %292, %295 : vector<2x128xf32>
    %c1_104 = arith.constant 1 : index
    %c0_105 = arith.constant 0 : index
    %c0_106 = arith.constant 0 : index
    %297 = vector.load %arg10[%c1_104, %c0_105, %c0_106] : memref<4x2x128xf32, #tpu.memory_space<vmem>>, vector<1x2x128xf32>
    %298 = vector.shape_cast %297 : vector<1x2x128xf32> to vector<2x128xf32>
    %299 = arith.addf %298, %294 : vector<2x128xf32>
    %c1_107 = arith.constant 1 : index
    %c0_108 = arith.constant 0 : index
    %c0_109 = arith.constant 0 : index
    %300 = vector.load %arg10[%c1_107, %c0_108, %c0_109] : memref<4x2x128xf32, #tpu.memory_space<vmem>>, vector<1x2x128xf32>
    %301 = vector.shape_cast %300 : vector<1x2x128xf32> to vector<2x128xf32>
    %302 = vector.shape_cast %299 : vector<2x128xf32> to vector<1x2x128xf32>
    tpu.vector_store %arg10[%c1_107, %c0_108, %c0_109], %302 {strides = array<i32>} : memref<4x2x128xf32, #tpu.memory_space<vmem>>, vector<1x2x128xf32>,
    %c1_110 = arith.constant 1 : index
    %c0_111 = arith.constant 0 : index
    %c0_112 = arith.constant 0 : index
    %303 = vector.load %arg11[%c1_110, %c0_111, %c0_112] : memref<4x2x128xf32, #tpu.memory_space<vmem>>, vector<1x2x128xf32>
    %304 = vector.shape_cast %303 : vector<1x2x128xf32> to vector<2x128xf32>
    %305 = arith.addf %304, %296 : vector<2x128xf32>
    %c1_113 = arith.constant 1 : index
    %c0_114 = arith.constant 0 : index
    %c0_115 = arith.constant 0 : index
    %306 = vector.load %arg11[%c1_113, %c0_114, %c0_115] : memref<4x2x128xf32, #tpu.memory_space<vmem>>, vector<1x2x128xf32>
    %307 = vector.shape_cast %306 : vector<1x2x128xf32> to vector<2x128xf32>
    %308 = vector.shape_cast %305 : vector<2x128xf32> to vector<1x2x128xf32>
    tpu.vector_store %arg11[%c1_113, %c0_114, %c0_115], %308 {strides = array<i32>} : memref<4x2x128xf32, #tpu.memory_space<vmem>>, vector<1x2x128xf32>,
    %c14_116 = arith.constant 14 : index
    %309 = memref.load %arg6[%c14_116] : memref<20xf32, #tpu.memory_space<smem>>
    %310 = vector.broadcast %309 : f32 to vector<2x256xf32>
    %311 = arith.mulf %310, %222 : vector<2x256xf32>
    %c10_117 = arith.constant 10 : index
    %312 = memref.load %arg6[%c10_117] : memref<20xf32, #tpu.memory_space<smem>>
    %313 = vector.broadcast %312 : f32 to vector<2x256xf32>
    %314 = arith.mulf %313, %200 : vector<2x256xf32>
    %315 = arith.addf %311, %314 : vector<2x256xf32>
    %c11_118 = arith.constant 11 : index
    %316 = memref.load %arg6[%c11_118] : memref<20xf32, #tpu.memory_space<smem>>
    %317 = vector.broadcast %316 : f32 to vector<2x256xf32>
    %318 = arith.mulf %317, %202 : vector<2x256xf32>
    %319 = arith.addf %315, %318 : vector<2x256xf32>
    %c12_119 = arith.constant 12 : index
    %320 = memref.load %arg6[%c12_119] : memref<20xf32, #tpu.memory_space<smem>>
    %321 = vector.broadcast %320 : f32 to vector<2x256xf32>
    %322 = arith.mulf %321, %204 : vector<2x256xf32>
    %323 = arith.addf %319, %322 : vector<2x256xf32>
    %c13_120 = arith.constant 13 : index
    %324 = memref.load %arg6[%c13_120] : memref<20xf32, #tpu.memory_space<smem>>
    %325 = vector.broadcast %324 : f32 to vector<2x256xf32>
    %326 = arith.mulf %325, %206 : vector<2x256xf32>
    %327 = arith.addf %323, %326 : vector<2x256xf32>
    %328 = arith.negf %327 : vector<2x256xf32>
    %329 = math.exp %328 : vector<2x256xf32>
    %cst_121 = arith.constant 1.000000e+00 : f32
    %330 = vector.broadcast %cst_121 : f32 to vector<2x256xf32>
    %331 = arith.addf %330, %329 : vector<2x256xf32>
    %332 = arith.divf %330, %331 : vector<2x256xf32>
    %333 = arith.mulf %204, %332 : vector<2x256xf32>
    %334 = vector.extract_strided_slice %333 {offsets = [0, 0], sizes = [2, 128], strides = [1, 1]} : vector<2x256xf32> to vector<2x128xf32>
    %335 = vector.extract_strided_slice %332 {offsets = [0, 0], sizes = [2, 128], strides = [1, 1]} : vector<2x256xf32> to vector<2x128xf32>
    %336 = vector.extract_strided_slice %333 {offsets = [0, 128], sizes = [2, 128], strides = [1, 1]} : vector<2x256xf32> to vector<2x128xf32>
    %337 = arith.addf %334, %336 : vector<2x128xf32>
    %338 = vector.extract_strided_slice %332 {offsets = [0, 128], sizes = [2, 128], strides = [1, 1]} : vector<2x256xf32> to vector<2x128xf32>
    %339 = arith.addf %335, %338 : vector<2x128xf32>
    %c2_122 = arith.constant 2 : index
    %c0_123 = arith.constant 0 : index
    %c0_124 = arith.constant 0 : index
    %340 = vector.load %arg10[%c2_122, %c0_123, %c0_124] : memref<4x2x128xf32, #tpu.memory_space<vmem>>, vector<1x2x128xf32>
    %341 = vector.shape_cast %340 : vector<1x2x128xf32> to vector<2x128xf32>
    %342 = arith.addf %341, %337 : vector<2x128xf32>
    %c2_125 = arith.constant 2 : index
    %c0_126 = arith.constant 0 : index
    %c0_127 = arith.constant 0 : index
    %343 = vector.load %arg10[%c2_125, %c0_126, %c0_127] : memref<4x2x128xf32, #tpu.memory_space<vmem>>, vector<1x2x128xf32>
    %344 = vector.shape_cast %343 : vector<1x2x128xf32> to vector<2x128xf32>
    %345 = vector.shape_cast %342 : vector<2x128xf32> to vector<1x2x128xf32>
    tpu.vector_store %arg10[%c2_125, %c0_126, %c0_127], %345 {strides = array<i32>} : memref<4x2x128xf32, #tpu.memory_space<vmem>>, vector<1x2x128xf32>,
    %c2_128 = arith.constant 2 : index
    %c0_129 = arith.constant 0 : index
    %c0_130 = arith.constant 0 : index
    %346 = vector.load %arg11[%c2_128, %c0_129, %c0_130] : memref<4x2x128xf32, #tpu.memory_space<vmem>>, vector<1x2x128xf32>
    %347 = vector.shape_cast %346 : vector<1x2x128xf32> to vector<2x128xf32>
    %348 = arith.addf %347, %339 : vector<2x128xf32>
    %c2_131 = arith.constant 2 : index
    %c0_132 = arith.constant 0 : index
    %c0_133 = arith.constant 0 : index
    %349 = vector.load %arg11[%c2_131, %c0_132, %c0_133] : memref<4x2x128xf32, #tpu.memory_space<vmem>>, vector<1x2x128xf32>
    %350 = vector.shape_cast %349 : vector<1x2x128xf32> to vector<2x128xf32>
    %351 = vector.shape_cast %348 : vector<2x128xf32> to vector<1x2x128xf32>
    tpu.vector_store %arg11[%c2_131, %c0_132, %c0_133], %351 {strides = array<i32>} : memref<4x2x128xf32, #tpu.memory_space<vmem>>, vector<1x2x128xf32>,
    %c19_134 = arith.constant 19 : index
    %352 = memref.load %arg6[%c19_134] : memref<20xf32, #tpu.memory_space<smem>>
    %353 = vector.broadcast %352 : f32 to vector<2x256xf32>
    %354 = arith.mulf %353, %222 : vector<2x256xf32>
    %c15_135 = arith.constant 15 : index
    %355 = memref.load %arg6[%c15_135] : memref<20xf32, #tpu.memory_space<smem>>
    %356 = vector.broadcast %355 : f32 to vector<2x256xf32>
    %357 = arith.mulf %356, %200 : vector<2x256xf32>
    %358 = arith.addf %354, %357 : vector<2x256xf32>
    %c16_136 = arith.constant 16 : index
    %359 = memref.load %arg6[%c16_136] : memref<20xf32, #tpu.memory_space<smem>>
    %360 = vector.broadcast %359 : f32 to vector<2x256xf32>
    %361 = arith.mulf %360, %202 : vector<2x256xf32>
    %362 = arith.addf %358, %361 : vector<2x256xf32>
    %c17_137 = arith.constant 17 : index
    %363 = memref.load %arg6[%c17_137] : memref<20xf32, #tpu.memory_space<smem>>
    %364 = vector.broadcast %363 : f32 to vector<2x256xf32>
    %365 = arith.mulf %364, %204 : vector<2x256xf32>
    %366 = arith.addf %362, %365 : vector<2x256xf32>
    %c18_138 = arith.constant 18 : index
    %367 = memref.load %arg6[%c18_138] : memref<20xf32, #tpu.memory_space<smem>>
    %368 = vector.broadcast %367 : f32 to vector<2x256xf32>
    %369 = arith.mulf %368, %206 : vector<2x256xf32>
    %370 = arith.addf %366, %369 : vector<2x256xf32>
    %371 = arith.negf %370 : vector<2x256xf32>
    %372 = math.exp %371 : vector<2x256xf32>
    %cst_139 = arith.constant 1.000000e+00 : f32
    %373 = vector.broadcast %cst_139 : f32 to vector<2x256xf32>
    %374 = arith.addf %373, %372 : vector<2x256xf32>
    %375 = arith.divf %373, %374 : vector<2x256xf32>
    %376 = arith.mulf %206, %375 : vector<2x256xf32>
    %377 = vector.extract_strided_slice %376 {offsets = [0, 0], sizes = [2, 128], strides = [1, 1]} : vector<2x256xf32> to vector<2x128xf32>
    %378 = vector.extract_strided_slice %375 {offsets = [0, 0], sizes = [2, 128], strides = [1, 1]} : vector<2x256xf32> to vector<2x128xf32>
    %379 = vector.extract_strided_slice %376 {offsets = [0, 128], sizes = [2, 128], strides = [1, 1]} : vector<2x256xf32> to vector<2x128xf32>
    %380 = arith.addf %377, %379 : vector<2x128xf32>
    %381 = vector.extract_strided_slice %375 {offsets = [0, 128], sizes = [2, 128], strides = [1, 1]} : vector<2x256xf32> to vector<2x128xf32>
    %382 = arith.addf %378, %381 : vector<2x128xf32>
    %c3_140 = arith.constant 3 : index
    %c0_141 = arith.constant 0 : index
    %c0_142 = arith.constant 0 : index
    %383 = vector.load %arg10[%c3_140, %c0_141, %c0_142] : memref<4x2x128xf32, #tpu.memory_space<vmem>>, vector<1x2x128xf32>
    %384 = vector.shape_cast %383 : vector<1x2x128xf32> to vector<2x128xf32>
    %385 = arith.addf %384, %380 : vector<2x128xf32>
    %c3_143 = arith.constant 3 : index
    %c0_144 = arith.constant 0 : index
    %c0_145 = arith.constant 0 : index
    %386 = vector.load %arg10[%c3_143, %c0_144, %c0_145] : memref<4x2x128xf32, #tpu.memory_space<vmem>>, vector<1x2x128xf32>
    %387 = vector.shape_cast %386 : vector<1x2x128xf32> to vector<2x128xf32>
    %388 = vector.shape_cast %385 : vector<2x128xf32> to vector<1x2x128xf32>
    tpu.vector_store %arg10[%c3_143, %c0_144, %c0_145], %388 {strides = array<i32>} : memref<4x2x128xf32, #tpu.memory_space<vmem>>, vector<1x2x128xf32>,
    %c3_146 = arith.constant 3 : index
    %c0_147 = arith.constant 0 : index
    %c0_148 = arith.constant 0 : index
    %389 = vector.load %arg11[%c3_146, %c0_147, %c0_148] : memref<4x2x128xf32, #tpu.memory_space<vmem>>, vector<1x2x128xf32>
    %390 = vector.shape_cast %389 : vector<1x2x128xf32> to vector<2x128xf32>
    %391 = arith.addf %390, %382 : vector<2x128xf32>
    %c3_149 = arith.constant 3 : index
    %c0_150 = arith.constant 0 : index
    %c0_151 = arith.constant 0 : index
    %392 = vector.load %arg11[%c3_149, %c0_150, %c0_151] : memref<4x2x128xf32, #tpu.memory_space<vmem>>, vector<1x2x128xf32>
    %393 = vector.shape_cast %392 : vector<1x2x128xf32> to vector<2x128xf32>
    %394 = vector.shape_cast %391 : vector<2x128xf32> to vector<1x2x128xf32>
    tpu.vector_store %arg11[%c3_149, %c0_150, %c0_151], %394 {strides = array<i32>} : memref<4x2x128xf32, #tpu.memory_space<vmem>>, vector<1x2x128xf32>,
    %c0_i32_152 = arith.constant 0 : i32
    %395 = arith.cmpi eq, %arg1, %c0_i32_152 : i32
    %396 = arith.extui %395 : i1 to i32
    %c0_i32_153 = arith.constant 0 : i32
    %397 = arith.cmpi ne, %396, %c0_i32_153 : i32
    scf.if %397 {
      %c0_154 = arith.constant 0 : index
      %c0_155 = arith.constant 0 : index
      %c0_156 = arith.constant 0 : index
      %398 = vector.load %arg8[%c0_154, %c0_155, %c0_156] : memref<4x2x128xf32, #tpu.memory_space<vmem>>, vector<1x2x128xf32>
      %399 = vector.shape_cast %398 : vector<1x2x128xf32> to vector<2x128xf32>
      %cst_157 = arith.constant dense<0.000000e+00> : vector<2xf32>
      %400 = vector.multi_reduction <add>, %399, %cst_157 [1] : vector<2x128xf32> to vector<2xf32>
      %401 = vector.shape_cast %400 : vector<2xf32> to vector<2x1xf32>
      %c0_158 = arith.constant 0 : index
      %c0_159 = arith.constant 0 : index
      %c0_160 = arith.constant 0 : index
      %402 = vector.load %arg9[%c0_158, %c0_159, %c0_160] : memref<4x2x128xf32, #tpu.memory_space<vmem>>, vector<1x2x128xf32>
      %403 = vector.shape_cast %402 : vector<1x2x128xf32> to vector<2x128xf32>
      %cst_161 = arith.constant dense<0.000000e+00> : vector<2xf32>
      %404 = vector.multi_reduction <add>, %403, %cst_161 [1] : vector<2x128xf32> to vector<2xf32>
      %405 = vector.shape_cast %404 : vector<2xf32> to vector<2x1xf32>
      %cst_162 = arith.constant 9.99999993E-9 : f32
      %406 = vector.broadcast %cst_162 : f32 to vector<2x1xf32>
      %407 = arith.addf %405, %406 : vector<2x1xf32>
      %408 = arith.divf %401, %407 : vector<2x1xf32>
      %c0_163 = arith.constant 0 : index
      %c0_164 = arith.constant 0 : index
      %c0_165 = arith.constant 0 : index
      %409 = vector.load %arg10[%c0_163, %c0_164, %c0_165] : memref<4x2x128xf32, #tpu.memory_space<vmem>>, vector<1x2x128xf32>
      %410 = vector.shape_cast %409 : vector<1x2x128xf32> to vector<2x128xf32>
      %cst_166 = arith.constant dense<0.000000e+00> : vector<2xf32>
      %411 = vector.multi_reduction <add>, %410, %cst_166 [1] : vector<2x128xf32> to vector<2xf32>
      %412 = vector.shape_cast %411 : vector<2xf32> to vector<2x1xf32>
      %c0_167 = arith.constant 0 : index
      %c0_168 = arith.constant 0 : index
      %c0_169 = arith.constant 0 : index
      %413 = vector.load %arg11[%c0_167, %c0_168, %c0_169] : memref<4x2x128xf32, #tpu.memory_space<vmem>>, vector<1x2x128xf32>
      %414 = vector.shape_cast %413 : vector<1x2x128xf32> to vector<2x128xf32>
      %cst_170 = arith.constant dense<0.000000e+00> : vector<2xf32>
      %415 = vector.multi_reduction <add>, %414, %cst_170 [1] : vector<2x128xf32> to vector<2xf32>
      %416 = vector.shape_cast %415 : vector<2xf32> to vector<2x1xf32>
      %cst_171 = arith.constant 9.99999993E-9 : f32
      %417 = vector.broadcast %cst_171 : f32 to vector<2x1xf32>
      %418 = arith.addf %416, %417 : vector<2x1xf32>
      %419 = arith.divf %412, %418 : vector<2x1xf32>
      %420 = arith.addf %408, %419 : vector<2x1xf32>
      %c0_172 = arith.constant 0 : index
      %c0_173 = arith.constant 0 : index
      %421 = vector.load %arg7[%c0_172, %c0_173] : memref<2x4xf32, #tpu.memory_space<vmem>>, vector<2x1xf32>
      tpu.vector_store %arg7[%c0_172, %c0_173], %420 {strides = array<i32>} : memref<2x4xf32, #tpu.memory_space<vmem>>, vector<2x1xf32>,
      %c1_174 = arith.constant 1 : index
      %c0_175 = arith.constant 0 : index
      %c0_176 = arith.constant 0 : index
      %422 = vector.load %arg8[%c1_174, %c0_175, %c0_176] : memref<4x2x128xf32, #tpu.memory_space<vmem>>, vector<1x2x128xf32>
      %423 = vector.shape_cast %422 : vector<1x2x128xf32> to vector<2x128xf32>
      %cst_177 = arith.constant dense<0.000000e+00> : vector<2xf32>
      %424 = vector.multi_reduction <add>, %423, %cst_177 [1] : vector<2x128xf32> to vector<2xf32>
      %425 = vector.shape_cast %424 : vector<2xf32> to vector<2x1xf32>
      %c1_178 = arith.constant 1 : index
      %c0_179 = arith.constant 0 : index
      %c0_180 = arith.constant 0 : index
      %426 = vector.load %arg9[%c1_178, %c0_179, %c0_180] : memref<4x2x128xf32, #tpu.memory_space<vmem>>, vector<1x2x128xf32>
      %427 = vector.shape_cast %426 : vector<1x2x128xf32> to vector<2x128xf32>
      %cst_181 = arith.constant dense<0.000000e+00> : vector<2xf32>
      %428 = vector.multi_reduction <add>, %427, %cst_181 [1] : vector<2x128xf32> to vector<2xf32>
      %429 = vector.shape_cast %428 : vector<2xf32> to vector<2x1xf32>
      %cst_182 = arith.constant 9.99999993E-9 : f32
      %430 = vector.broadcast %cst_182 : f32 to vector<2x1xf32>
      %431 = arith.addf %429, %430 : vector<2x1xf32>
      %432 = arith.divf %425, %431 : vector<2x1xf32>
      %c1_183 = arith.constant 1 : index
      %c0_184 = arith.constant 0 : index
      %c0_185 = arith.constant 0 : index
      %433 = vector.load %arg10[%c1_183, %c0_184, %c0_185] : memref<4x2x128xf32, #tpu.memory_space<vmem>>, vector<1x2x128xf32>
      %434 = vector.shape_cast %433 : vector<1x2x128xf32> to vector<2x128xf32>
      %cst_186 = arith.constant dense<0.000000e+00> : vector<2xf32>
      %435 = vector.multi_reduction <add>, %434, %cst_186 [1] : vector<2x128xf32> to vector<2xf32>
      %436 = vector.shape_cast %435 : vector<2xf32> to vector<2x1xf32>
      %c1_187 = arith.constant 1 : index
      %c0_188 = arith.constant 0 : index
      %c0_189 = arith.constant 0 : index
      %437 = vector.load %arg11[%c1_187, %c0_188, %c0_189] : memref<4x2x128xf32, #tpu.memory_space<vmem>>, vector<1x2x128xf32>
      %438 = vector.shape_cast %437 : vector<1x2x128xf32> to vector<2x128xf32>
      %cst_190 = arith.constant dense<0.000000e+00> : vector<2xf32>
      %439 = vector.multi_reduction <add>, %438, %cst_190 [1] : vector<2x128xf32> to vector<2xf32>
      %440 = vector.shape_cast %439 : vector<2xf32> to vector<2x1xf32>
      %cst_191 = arith.constant 9.99999993E-9 : f32
      %441 = vector.broadcast %cst_191 : f32 to vector<2x1xf32>
      %442 = arith.addf %440, %441 : vector<2x1xf32>
      %443 = arith.divf %436, %442 : vector<2x1xf32>
      %444 = arith.addf %432, %443 : vector<2x1xf32>
      %c0_192 = arith.constant 0 : index
      %c1_193 = arith.constant 1 : index
      %445 = vector.load %arg7[%c0_192, %c1_193] : memref<2x4xf32, #tpu.memory_space<vmem>>, vector<2x1xf32>
      tpu.vector_store %arg7[%c0_192, %c1_193], %444 {strides = array<i32>} : memref<2x4xf32, #tpu.memory_space<vmem>>, vector<2x1xf32>,
      %c2_194 = arith.constant 2 : index
      %c0_195 = arith.constant 0 : index
      %c0_196 = arith.constant 0 : index
      %446 = vector.load %arg8[%c2_194, %c0_195, %c0_196] : memref<4x2x128xf32, #tpu.memory_space<vmem>>, vector<1x2x128xf32>
      %447 = vector.shape_cast %446 : vector<1x2x128xf32> to vector<2x128xf32>
      %cst_197 = arith.constant dense<0.000000e+00> : vector<2xf32>
      %448 = vector.multi_reduction <add>, %447, %cst_197 [1] : vector<2x128xf32> to vector<2xf32>
      %449 = vector.shape_cast %448 : vector<2xf32> to vector<2x1xf32>
      %c2_198 = arith.constant 2 : index
      %c0_199 = arith.constant 0 : index
      %c0_200 = arith.constant 0 : index
      %450 = vector.load %arg9[%c2_198, %c0_199, %c0_200] : memref<4x2x128xf32, #tpu.memory_space<vmem>>, vector<1x2x128xf32>
      %451 = vector.shape_cast %450 : vector<1x2x128xf32> to vector<2x128xf32>
      %cst_201 = arith.constant dense<0.000000e+00> : vector<2xf32>
      %452 = vector.multi_reduction <add>, %451, %cst_201 [1] : vector<2x128xf32> to vector<2xf32>
      %453 = vector.shape_cast %452 : vector<2xf32> to vector<2x1xf32>
      %cst_202 = arith.constant 9.99999993E-9 : f32
      %454 = vector.broadcast %cst_202 : f32 to vector<2x1xf32>
      %455 = arith.addf %453, %454 : vector<2x1xf32>
      %456 = arith.divf %449, %455 : vector<2x1xf32>
      %c2_203 = arith.constant 2 : index
      %c0_204 = arith.constant 0 : index
      %c0_205 = arith.constant 0 : index
      %457 = vector.load %arg10[%c2_203, %c0_204, %c0_205] : memref<4x2x128xf32, #tpu.memory_space<vmem>>, vector<1x2x128xf32>
      %458 = vector.shape_cast %457 : vector<1x2x128xf32> to vector<2x128xf32>
      %cst_206 = arith.constant dense<0.000000e+00> : vector<2xf32>
      %459 = vector.multi_reduction <add>, %458, %cst_206 [1] : vector<2x128xf32> to vector<2xf32>
      %460 = vector.shape_cast %459 : vector<2xf32> to vector<2x1xf32>
      %c2_207 = arith.constant 2 : index
      %c0_208 = arith.constant 0 : index
      %c0_209 = arith.constant 0 : index
      %461 = vector.load %arg11[%c2_207, %c0_208, %c0_209] : memref<4x2x128xf32, #tpu.memory_space<vmem>>, vector<1x2x128xf32>
      %462 = vector.shape_cast %461 : vector<1x2x128xf32> to vector<2x128xf32>
      %cst_210 = arith.constant dense<0.000000e+00> : vector<2xf32>
      %463 = vector.multi_reduction <add>, %462, %cst_210 [1] : vector<2x128xf32> to vector<2xf32>
      %464 = vector.shape_cast %463 : vector<2xf32> to vector<2x1xf32>
      %cst_211 = arith.constant 9.99999993E-9 : f32
      %465 = vector.broadcast %cst_211 : f32 to vector<2x1xf32>
      %466 = arith.addf %464, %465 : vector<2x1xf32>
      %467 = arith.divf %460, %466 : vector<2x1xf32>
      %468 = arith.addf %456, %467 : vector<2x1xf32>
      %c0_212 = arith.constant 0 : index
      %c2_213 = arith.constant 2 : index
      %469 = vector.load %arg7[%c0_212, %c2_213] : memref<2x4xf32, #tpu.memory_space<vmem>>, vector<2x1xf32>
      tpu.vector_store %arg7[%c0_212, %c2_213], %468 {strides = array<i32>} : memref<2x4xf32, #tpu.memory_space<vmem>>, vector<2x1xf32>,
      %c3_214 = arith.constant 3 : index
      %c0_215 = arith.constant 0 : index
      %c0_216 = arith.constant 0 : index
      %470 = vector.load %arg8[%c3_214, %c0_215, %c0_216] : memref<4x2x128xf32, #tpu.memory_space<vmem>>, vector<1x2x128xf32>
      %471 = vector.shape_cast %470 : vector<1x2x128xf32> to vector<2x128xf32>
      %cst_217 = arith.constant dense<0.000000e+00> : vector<2xf32>
      %472 = vector.multi_reduction <add>, %471, %cst_217 [1] : vector<2x128xf32> to vector<2xf32>
      %473 = vector.shape_cast %472 : vector<2xf32> to vector<2x1xf32>
      %c3_218 = arith.constant 3 : index
      %c0_219 = arith.constant 0 : index
      %c0_220 = arith.constant 0 : index
      %474 = vector.load %arg9[%c3_218, %c0_219, %c0_220] : memref<4x2x128xf32, #tpu.memory_space<vmem>>, vector<1x2x128xf32>
      %475 = vector.shape_cast %474 : vector<1x2x128xf32> to vector<2x128xf32>
      %cst_221 = arith.constant dense<0.000000e+00> : vector<2xf32>
      %476 = vector.multi_reduction <add>, %475, %cst_221 [1] : vector<2x128xf32> to vector<2xf32>
      %477 = vector.shape_cast %476 : vector<2xf32> to vector<2x1xf32>
      %cst_222 = arith.constant 9.99999993E-9 : f32
      %478 = vector.broadcast %cst_222 : f32 to vector<2x1xf32>
      %479 = arith.addf %477, %478 : vector<2x1xf32>
      %480 = arith.divf %473, %479 : vector<2x1xf32>
      %c3_223 = arith.constant 3 : index
      %c0_224 = arith.constant 0 : index
      %c0_225 = arith.constant 0 : index
      %481 = vector.load %arg10[%c3_223, %c0_224, %c0_225] : memref<4x2x128xf32, #tpu.memory_space<vmem>>, vector<1x2x128xf32>
      %482 = vector.shape_cast %481 : vector<1x2x128xf32> to vector<2x128xf32>
      %cst_226 = arith.constant dense<0.000000e+00> : vector<2xf32>
      %483 = vector.multi_reduction <add>, %482, %cst_226 [1] : vector<2x128xf32> to vector<2xf32>
      %484 = vector.shape_cast %483 : vector<2xf32> to vector<2x1xf32>
      %c3_227 = arith.constant 3 : index
      %c0_228 = arith.constant 0 : index
      %c0_229 = arith.constant 0 : index
      %485 = vector.load %arg11[%c3_227, %c0_228, %c0_229] : memref<4x2x128xf32, #tpu.memory_space<vmem>>, vector<1x2x128xf32>
      %486 = vector.shape_cast %485 : vector<1x2x128xf32> to vector<2x128xf32>
      %cst_230 = arith.constant dense<0.000000e+00> : vector<2xf32>
      %487 = vector.multi_reduction <add>, %486, %cst_230 [1] : vector<2x128xf32> to vector<2xf32>
      %488 = vector.shape_cast %487 : vector<2xf32> to vector<2x1xf32>
      %cst_231 = arith.constant 9.99999993E-9 : f32
      %489 = vector.broadcast %cst_231 : f32 to vector<2x1xf32>
      %490 = arith.addf %488, %489 : vector<2x1xf32>
      %491 = arith.divf %484, %490 : vector<2x1xf32>
      %492 = arith.addf %480, %491 : vector<2x1xf32>
      %c0_232 = arith.constant 0 : index
      %c3_233 = arith.constant 3 : index
      %493 = vector.load %arg7[%c0_232, %c3_233] : memref<2x4xf32, #tpu.memory_space<vmem>>, vector<2x1xf32>
      tpu.vector_store %arg7[%c0_232, %c3_233], %492 {strides = array<i32>} : memref<2x4xf32, #tpu.memory_space<vmem>>, vector<2x1xf32>,
    } else {
    }
    return
  }
  func.func @transform_0(%arg0: i32, %arg1: i32) -> (i32, i32, i32) {
    %c0_i32 = arith.constant 0 : i32
    %c0_i32_0 = arith.constant 0 : i32
    return %c0_i32, %arg0, %arg1 : i32, i32, i32
  }
  func.func @transform_1(%arg0: i32, %arg1: i32) -> (i32, i32, i32) {
    %c0_i32 = arith.constant 0 : i32
    %c0_i32_0 = arith.constant 0 : i32
    return %c0_i32, %arg0, %arg1 : i32, i32, i32
  }
  func.func @transform_2(%arg0: i32, %arg1: i32) -> (i32, i32) {
    %c0_i32 = arith.constant 0 : i32
    %c0_i32_0 = arith.constant 0 : i32
    return %arg0, %c0_i32 : i32, i32
  }
  func.func @transform_3(%arg0: i32, %arg1: i32) -> (i32, i32) {
    %c0_i32 = arith.constant 0 : i32
    %c0_i32_0 = arith.constant 0 : i32
    return %arg0, %c0_i32 : i32, i32
  }
  func.func @transform_4(%arg0: i32, %arg1: i32) -> i32 {
    %c0_i32 = arith.constant 0 : i32
    %c0_i32_0 = arith.constant 0 : i32
    return %c0_i32 : i32
  }
  func.func @transform_5(%arg0: i32, %arg1: i32) -> (i32, i32) {
    %c0_i32 = arith.constant 0 : i32
    %c0_i32_0 = arith.constant 0 : i32
    return %arg0, %c0_i32 : i32, i32
  }
}

</mosaic_0001>

<llo_original>
// kernel: cpdfp_forward.1
$region0: #{cpdfp_forward.1}
  #allocation0 [shape = 'u32[]', space=smem, size = 0x4, offset = 0x4, fixed_abs, tag = 'smem constant byte address 0x4 - core index']
  #allocation1 [shape = 'u32[144,128]{1,0:T(1,128)}', space=vmem, size = 0x12000, scoped, tag = 'internal scratch']
  #allocation2 [shape = 'f32[4,2,128]{2,1,0:T(2,128)}', space=vmem, size = 0x1000, scoped, tag = 'scratch operand']
  #allocation3 [shape = 'f32[4,2,128]{2,1,0:T(2,128)}', space=vmem, size = 0x1000, scoped, tag = 'scratch operand']
  #allocation4 [shape = 'f32[4,2,128]{2,1,0:T(2,128)}', space=vmem, size = 0x1000, scoped, tag = 'scratch operand']
  #allocation5 [shape = 'f32[4,2,128]{2,1,0:T(2,128)}', space=vmem, size = 0x1000, scoped, tag = 'scratch operand']
  %s0 = inlined_call_operand.vmem [shape: f32[4,2,256], index: 0, kind: input, shape index: {}]
  %s1 = inlined_call_operand.vmem [shape: f32[4,2,256], index: 1, kind: input, shape index: {}]
  %s2 = inlined_call_operand.vmem [shape: f32[2,4], index: 2, kind: input, shape index: {}]
  %s3 = inlined_call_operand.vmem [shape: f32[2,4], index: 3, kind: input, shape index: {}]
  %s4 = inlined_call_operand.vmem [shape: f32[20], index: 4, kind: input, shape index: {}]
  %s5 = inlined_call_operand.hbm [shape: f32[2,4], index: 5, kind: output, shape index: {}]
  %s6 = sld [smem:[#allocation0]]
  $region42: #{cpdfp_forward.1} parent=0
    _
  %s8 = ssub.s32 1, %s6
  %s9 = scalar_select 0, %s8, %s6
  $region1: #{cpdfp_forward.1} parent=0
    #allocation6 [shape = 'u8[512]{0}', space=smem, size = 0x200, scoped, tag = 'input window, operand 4, single buffered']
    #allocation7 [shape = 's32[1]{0}', space=sflag, size = 0x4, scoped, tag = 'scoped memory for cpdfp_forward.1']
    #allocation8 [shape = 's32[1]{0}', space=sflag, size = 0x4, scoped, tag = 'scoped memory for cpdfp_forward.1']
    #allocation9 [shape = 'u8[1024]{0}', space=vmem, size = 0x400, scoped, tag = 'output window, operand 0, single buffered']
    %10 = vsyncpa [#allocation8], 0
    %11 = vsyncpa [#allocation7], 0
    // Predicated region
    $region2: #{cpdfp_forward.1} parent=1 // pred_check
      _
    $region3: #{cpdfp_forward.1} parent=1 // pred_check_branch
      %13 = sbr.rel (0) target = $region5
    $region4: #{cpdfp_forward.1} parent=1 // pred_region
      _
    $region5: #{cpdfp_forward.1} parent=1 // pred_fallthru
      _
    // Predicated region
    $region6: #{cpdfp_forward.1} parent=1 // pred_check
      _
    $region7: #{cpdfp_forward.1} parent=1 // pred_check_branch
      %15 = sbr.rel (0) target = $region9
    $region8: #{cpdfp_forward.1} parent=1 // pred_region
      _
    $region9: #{cpdfp_forward.1} parent=1 // pred_fallthru
      _
    // Predicated region
    $region10: #{cpdfp_forward.1} parent=1 // pred_check
      _
    $region11: #{cpdfp_forward.1} parent=1 // pred_check_branch
      %17 = sbr.rel (0) target = $region13
    $region12: #{cpdfp_forward.1} parent=1 // pred_region
      _
    $region13: #{cpdfp_forward.1} parent=1 // pred_fallthru
      _
    // Predicated region
    $region14: #{cpdfp_forward.1} parent=1 // pred_check
      _
    $region15: #{cpdfp_forward.1} parent=1 // pred_check_branch
      %19 = sbr.rel (0) target = $region17
    $region16: #{cpdfp_forward.1} parent=1 // pred_region
      _
    $region17: #{cpdfp_forward.1} parent=1 // pred_fallthru
      _
    // Predicated region
    $region18: #{cpdfp_forward.1} parent=1 // pred_check
      _
    $region19: #{cpdfp_forward.1} parent=1 // pred_check_branch
      %21 = sbr.rel (0) target = $region21
    $region20: #{cpdfp_forward.1} parent=1 // pred_region
      %s23 = ssub.s32 16, 16
      %24 = vsyncadd [#allocation8], %s23
      %s26 = sshll.u32 %s4, 4
      %s27 = int_to_ptr.vmem [resolvable:$true] %s26
      %29 = dma.vmem_to_smem %s27, 16, [#allocation6], [#allocation8]
    $region21: #{cpdfp_forward.1} parent=1 // pred_fallthru
      _
    // Predicated region
    $region22: #{cpdfp_forward.1} parent=1 // pred_check
      _
    $region23: #{cpdfp_forward.1} parent=1 // pred_check_branch
      %31 = sbr.rel (0) target = $region25
    $region24: #{cpdfp_forward.1} parent=1 // pred_region
      %32 = dma.done [#allocation8], 16
    $region25: #{cpdfp_forward.1} parent=1 // pred_fallthru
      _
    %33 = sfence
    %p34 = scmp.eq.s32.totalorder 0, 0
    // Predicated region
    $region26: #{cpdfp_forward.1} parent=1 // pred_check
      %p35 = pneg %p34
    $region27: #{cpdfp_forward.1} parent=1 // pred_check_branch
      %37 = sbr.rel (%p35) target = $region29
    $region28: #{cpdfp_forward.1} parent=1 // pred_region
      %38 = vst [vmem:[#allocation2] sm:$0x3] 0.0
      %39 = vst [vmem:[#allocation2 + $0x2] sm:$0x3] 0.0
      %40 = vst [vmem:[#allocation2 + $0x4] sm:$0x3] 0.0
      %41 = vst [vmem:[#allocation2 + $0x6] sm:$0x3] 0.0
      %42 = vst [vmem:[#allocation3] sm:$0x3] 0.0
      %43 = vst [vmem:[#allocation3 + $0x2] sm:$0x3] 0.0
      %44 = vst [vmem:[#allocation3 + $0x4] sm:$0x3] 0.0
      %45 = vst [vmem:[#allocation3 + $0x6] sm:$0x3] 0.0
      %46 = vst [vmem:[#allocation4] sm:$0x3] 0.0
      %47 = vst [vmem:[#allocation4 + $0x2] sm:$0x3] 0.0
      %48 = vst [vmem:[#allocation4 + $0x4] sm:$0x3] 0.0
      %49 = vst [vmem:[#allocation4 + $0x6] sm:$0x3] 0.0
      %50 = vst [vmem:[#allocation5] sm:$0x3] 0.0
      %51 = vst [vmem:[#allocation5 + $0x2] sm:$0x3] 0.0
      %52 = vst [vmem:[#allocation5 + $0x4] sm:$0x3] 0.0
      %53 = vst [vmem:[#allocation5 + $0x6] sm:$0x3] 0.0
    $region29: #{cpdfp_forward.1} parent=1 // pred_fallthru
      _
    %v54 = vld [vmem:[%s0] sm:$0xf]
    %s55 = scalar_lea.vmem %s0, 4
    %v56 = vld [vmem:[%s55] sm:$0xf]
    %s57 = scalar_lea.vmem %s0, 8
    %v58 = vld [vmem:[%s57] sm:$0xf]
    %s59 = scalar_lea.vmem %s0, 12
    %v60 = vld [vmem:[%s59] sm:$0xf]
    %v61 = vld [vmem:[%s2] sm:$0x3]
    %63 = vset.pattern.permute.xlu0 0
    %64 = vperm.xlu0 %63, %v61
    %v65 = vpop.permute.xlu0 %64
    %v67 = vunpack.c.l.s4 269488144
    %v68 = vunpack.c.0.s8 %v67
    %v69 = vlaneseq
    %v70 = vshrl.u32 %v69, 7
    %v71 = vsub.s32 %v68, %v70
    %v72 = vrot.slane %v65, %v71
    %v74 = vmul.f32 %v54, %v72
    %75 = vset.pattern.permute.xlu0 1
    %76 = vperm.xlu0 %75, %v61
    %v77 = vpop.permute.xlu0 %76
    %v79 = vunpack.c.l.s4 269488144
    %v80 = vunpack.c.0.s8 %v79
    %v81 = vlaneseq
    %v82 = vshrl.u32 %v81, 7
    %v83 = vsub.s32 %v80, %v82
    %v84 = vrot.slane %v77, %v83
    %v86 = vmul.f32 %v56, %v84
    %v87 = vadd.f32 %v74, %v86
    %88 = vset.pattern.permute.xlu0 2
    %89 = vperm.xlu0 %88, %v61
    %v90 = vpop.permute.xlu0 %89
    %v92 = vunpack.c.l.s4 269488144
    %v93 = vunpack.c.0.s8 %v92
    %v94 = vlaneseq
    %v95 = vshrl.u32 %v94, 7
    %v96 = vsub.s32 %v93, %v95
    %v97 = vrot.slane %v90, %v96
    %v99 = vmul.f32 %v58, %v97
    %v100 = vadd.f32 %v87, %v99
    %101 = vset.pattern.permute.xlu0 3
    %102 = vperm.xlu0 %101, %v61
    %v103 = vpop.permute.xlu0 %102
    %v105 = vunpack.c.l.s4 269488144
    %v106 = vunpack.c.0.s8 %v105
    %v107 = vlaneseq
    %v108 = vshrl.u32 %v107, 7
    %v109 = vsub.s32 %v106, %v108
    %v110 = vrot.slane %v103, %v109
    %v112 = vmul.f32 %v60, %v110
    %v113 = vadd.f32 %v100, %v112
    %s114 = sld [smem:[#allocation6 + $0x4]]
    %v115 = vstv %s114
    %v116 = vmul.f32 %v115, %v113
    %s117 = sld [smem:[#allocation6]]
    %v118 = vstv %s117
    %v119 = vmul.f32 %v118, %v54
    %v120 = vadd.f32 %v116, %v119
    %s121 = sld [smem:[#allocation6 + $0x1]]
    %v122 = vstv %s121
    %v123 = vmul.f32 %v122, %v56
    %v124 = vadd.f32 %v120, %v123
    %s125 = sld [smem:[#allocation6 + $0x2]]
    %v126 = vstv %s125
    %v127 = vmul.f32 %v126, %v58
    %v128 = vadd.f32 %v124, %v127
    %s129 = sld [smem:[#allocation6 + $0x3]]
    %v130 = vstv %s129
    %v131 = vmul.f32 %v130, %v60
    %v132 = vadd.f32 %v128, %v131
    %v133 = vxor.u32 %v132, 2147483648
    %v134 = vmul.f32 %v133, 1.442695
    %v135 = vpow.pop %v134
    %v136 = vadd.f32 %v135, 1.0
    %v137 = vrcp.pop %v136
    %v138 = vmul.f32 1.0, %v137
    %v139 = vmul.f32 %v54, %v138
    %v141 = vrot.slane %v139, 2
    %v143 = vadd.f32 %v139, %v141
    %v145 = vrot.slane %v138, 2
    %v147 = vadd.f32 %v138, %v145
    %v148 = vld [vmem:[#allocation2] sm:$0x3]
    %v149 = vadd.f32 %v148, %v143
    %150 = vst [vmem:[#allocation2] sm:$0x3] %v149
    %v151 = vld [vmem:[#allocation3] sm:$0x3]
    %v152 = vadd.f32 %v151, %v147
    %153 = vst [vmem:[#allocation3] sm:$0x3] %v152
    %s154 = sld [smem:[#allocation6 + $0x9]]
    %v155 = vstv %s154
    %v156 = vmul.f32 %v155, %v113
    %s157 = sld [smem:[#allocation6 + $0x5]]
    %v158 = vstv %s157
    %v159 = vmul.f32 %v158, %v54
    %v160 = vadd.f32 %v156, %v159
    %s161 = sld [smem:[#allocation6 + $0x6]]
    %v162 = vstv %s161
    %v163 = vmul.f32 %v162, %v56
    %v164 = vadd.f32 %v160, %v163
    %s165 = sld [smem:[#allocation6 + $0x7]]
    %v166 = vstv %s165
    %v167 = vmul.f32 %v166, %v58
    %v168 = vadd.f32 %v164, %v167
    %s169 = sld [smem:[#allocation6 + $0x8]]
    %v170 = vstv %s169
    %v171 = vmul.f32 %v170, %v60
    %v172 = vadd.f32 %v168, %v171
    %v173 = vxor.u32 %v172, 2147483648
    %v174 = vmul.f32 %v173, 1.442695
    %v175 = vpow.pop %v174
    %v176 = vadd.f32 %v175, 1.0
    %v177 = vrcp.pop %v176
    %v178 = vmul.f32 1.0, %v177
    %v179 = vmul.f32 %v56, %v178
    %v181 = vrot.slane %v179, 2
    %v183 = vadd.f32 %v179, %v181
    %v185 = vrot.slane %v178, 2
    %v187 = vadd.f32 %v178, %v185
    %s188 = scalar_lea.vmem [#allocation2], 2
    %v189 = vld [vmem:[%s188] sm:$0x3]
    %v190 = vadd.f32 %v189, %v183
    %191 = vst [vmem:[%s188] sm:$0x3] %v190
    %s192 = scalar_lea.vmem [#allocation3], 2
    %v193 = vld [vmem:[%s192] sm:$0x3]
    %v194 = vadd.f32 %v193, %v187
    %195 = vst [vmem:[%s192] sm:$0x3] %v194
    %s196 = sld [smem:[#allocation6 + $0xe]]
    %v197 = vstv %s196
    %v198 = vmul.f32 %v197, %v113
    %s199 = sld [smem:[#allocation6 + $0xa]]
    %v200 = vstv %s199
    %v201 = vmul.f32 %v200, %v54
    %v202 = vadd.f32 %v198, %v201
    %s203 = sld [smem:[#allocation6 + $0xb]]
    %v204 = vstv %s203
    %v205 = vmul.f32 %v204, %v56
    %v206 = vadd.f32 %v202, %v205
    %s207 = sld [smem:[#allocation6 + $0xc]]
    %v208 = vstv %s207
    %v209 = vmul.f32 %v208, %v58
    %v210 = vadd.f32 %v206, %v209
    %s211 = sld [smem:[#allocation6 + $0xd]]
    %v212 = vstv %s211
    %v213 = vmul.f32 %v212, %v60
    %v214 = vadd.f32 %v210, %v213
    %v215 = vxor.u32 %v214, 2147483648
    %v216 = vmul.f32 %v215, 1.442695
    %v217 = vpow.pop %v216
    %v218 = vadd.f32 %v217, 1.0
    %v219 = vrcp.pop %v218
    %v220 = vmul.f32 1.0, %v219
    %v221 = vmul.f32 %v58, %v220
    %v223 = vrot.slane %v221, 2
    %v225 = vadd.f32 %v221, %v223
    %v227 = vrot.slane %v220, 2
    %v229 = vadd.f32 %v220, %v227
    %s230 = scalar_lea.vmem [#allocation2], 4
    %v231 = vld [vmem:[%s230] sm:$0x3]
    %v232 = vadd.f32 %v231, %v225
    %233 = vst [vmem:[%s230] sm:$0x3] %v232
    %s234 = scalar_lea.vmem [#allocation3], 4
    %v235 = vld [vmem:[%s234] sm:$0x3]
    %v236 = vadd.f32 %v235, %v229
    %237 = vst [vmem:[%s234] sm:$0x3] %v236
    %s238 = sld [smem:[#allocation6 + $0x13]]
    %v239 = vstv %s238
    %v240 = vmul.f32 %v239, %v113
    %s241 = sld [smem:[#allocation6 + $0xf]]
    %v242 = vstv %s241
    %v243 = vmul.f32 %v242, %v54
    %v244 = vadd.f32 %v240, %v243
    %s245 = sld [smem:[#allocation6 + $0x10]]
    %v246 = vstv %s245
    %v247 = vmul.f32 %v246, %v56
    %v248 = vadd.f32 %v244, %v247
    %s249 = sld [smem:[#allocation6 + $0x11]]
    %v250 = vstv %s249
    %v251 = vmul.f32 %v250, %v58
    %v252 = vadd.f32 %v248, %v251
    %s253 = sld [smem:[#allocation6 + $0x12]]
    %v254 = vstv %s253
    %v255 = vmul.f32 %v254, %v60
    %v256 = vadd.f32 %v252, %v255
    %v257 = vxor.u32 %v256, 2147483648
    %v258 = vmul.f32 %v257, 1.442695
    %v259 = vpow.pop %v258
    %v260 = vadd.f32 %v259, 1.0
    %v261 = vrcp.pop %v260
    %v262 = vmul.f32 1.0, %v261
    %v263 = vmul.f32 %v60, %v262
    %v265 = vrot.slane %v263, 2
    %v267 = vadd.f32 %v263, %v265
    %v269 = vrot.slane %v262, 2
    %v271 = vadd.f32 %v262, %v269
    %s272 = scalar_lea.vmem [#allocation2], 6
    %v273 = vld [vmem:[%s272] sm:$0x3]
    %v274 = vadd.f32 %v273, %v267
    %275 = vst [vmem:[%s272] sm:$0x3] %v274
    %s276 = scalar_lea.vmem [#allocation3], 6
    %v277 = vld [vmem:[%s276] sm:$0x3]
    %v278 = vadd.f32 %v277, %v271
    %279 = vst [vmem:[%s276] sm:$0x3] %v278
    %v280 = vld [vmem:[%s1] sm:$0xf]
    %s281 = scalar_lea.vmem %s1, 4
    %v282 = vld [vmem:[%s281] sm:$0xf]
    %s283 = scalar_lea.vmem %s1, 8
    %v284 = vld [vmem:[%s283] sm:$0xf]
    %s285 = scalar_lea.vmem %s1, 12
    %v286 = vld [vmem:[%s285] sm:$0xf]
    %v287 = vld [vmem:[%s3] sm:$0x3]
    %289 = vset.pattern.permute.xlu0 0
    %290 = vperm.xlu0 %289, %v287
    %v291 = vpop.permute.xlu0 %290
    %v293 = vunpack.c.l.s4 269488144
    %v294 = vunpack.c.0.s8 %v293
    %v295 = vlaneseq
    %v296 = vshrl.u32 %v295, 7
    %v297 = vsub.s32 %v294, %v296
    %v298 = vrot.slane %v291, %v297
    %v300 = vmul.f32 %v280, %v298
    %301 = vset.pattern.permute.xlu0 1
    %302 = vperm.xlu0 %301, %v287
    %v303 = vpop.permute.xlu0 %302
    %v305 = vunpack.c.l.s4 269488144
    %v306 = vunpack.c.0.s8 %v305
    %v307 = vlaneseq
    %v308 = vshrl.u32 %v307, 7
    %v309 = vsub.s32 %v306, %v308
    %v310 = vrot.slane %v303, %v309
    %v312 = vmul.f32 %v282, %v310
    %v313 = vadd.f32 %v300, %v312
    %314 = vset.pattern.permute.xlu0 2
    %315 = vperm.xlu0 %314, %v287
    %v316 = vpop.permute.xlu0 %315
    %v318 = vunpack.c.l.s4 269488144
    %v319 = vunpack.c.0.s8 %v318
    %v320 = vlaneseq
    %v321 = vshrl.u32 %v320, 7
    %v322 = vsub.s32 %v319, %v321
    %v323 = vrot.slane %v316, %v322
    %v325 = vmul.f32 %v284, %v323
    %v326 = vadd.f32 %v313, %v325
    %327 = vset.pattern.permute.xlu0 3
    %328 = vperm.xlu0 %327, %v287
    %v329 = vpop.permute.xlu0 %328
    %v331 = vunpack.c.l.s4 269488144
    %v332 = vunpack.c.0.s8 %v331
    %v333 = vlaneseq
    %v334 = vshrl.u32 %v333, 7
    %v335 = vsub.s32 %v332, %v334
    %v336 = vrot.slane %v329, %v335
    %v338 = vmul.f32 %v286, %v336
    %v339 = vadd.f32 %v326, %v338
    %s340 = sld [smem:[#allocation6 + $0x4]]
    %v341 = vstv %s340
    %v342 = vmul.f32 %v341, %v339
    %s343 = sld [smem:[#allocation6]]
    %v344 = vstv %s343
    %v345 = vmul.f32 %v344, %v280
    %v346 = vadd.f32 %v342, %v345
    %s347 = sld [smem:[#allocation6 + $0x1]]
    %v348 = vstv %s347
    %v349 = vmul.f32 %v348, %v282
    %v350 = vadd.f32 %v346, %v349
    %s351 = sld [smem:[#allocation6 + $0x2]]
    %v352 = vstv %s351
    %v353 = vmul.f32 %v352, %v284
    %v354 = vadd.f32 %v350, %v353
    %s355 = sld [smem:[#allocation6 + $0x3]]
    %v356 = vstv %s355
    %v357 = vmul.f32 %v356, %v286
    %v358 = vadd.f32 %v354, %v357
    %v359 = vxor.u32 %v358, 2147483648
    %v360 = vmul.f32 %v359, 1.442695
    %v361 = vpow.pop %v360
    %v362 = vadd.f32 %v361, 1.0
    %v363 = vrcp.pop %v362
    %v364 = vmul.f32 1.0, %v363
    %v365 = vmul.f32 %v280, %v364
    %v367 = vrot.slane %v365, 2
    %v369 = vadd.f32 %v365, %v367
    %v371 = vrot.slane %v364, 2
    %v373 = vadd.f32 %v364, %v371
    %v374 = vld [vmem:[#allocation4] sm:$0x3]
    %v375 = vadd.f32 %v374, %v369
    %376 = vst [vmem:[#allocation4] sm:$0x3] %v375
    %v377 = vld [vmem:[#allocation5] sm:$0x3]
    %v378 = vadd.f32 %v377, %v373
    %379 = vst [vmem:[#allocation5] sm:$0x3] %v378
    %s380 = sld [smem:[#allocation6 + $0x9]]
    %v381 = vstv %s380
    %v382 = vmul.f32 %v381, %v339
    %s383 = sld [smem:[#allocation6 + $0x5]]
    %v384 = vstv %s383
    %v385 = vmul.f32 %v384, %v280
    %v386 = vadd.f32 %v382, %v385
    %s387 = sld [smem:[#allocation6 + $0x6]]
    %v388 = vstv %s387
    %v389 = vmul.f32 %v388, %v282
    %v390 = vadd.f32 %v386, %v389
    %s391 = sld [smem:[#allocation6 + $0x7]]
    %v392 = vstv %s391
    %v393 = vmul.f32 %v392, %v284
    %v394 = vadd.f32 %v390, %v393
    %s395 = sld [smem:[#allocation6 + $0x8]]
    %v396 = vstv %s395
    %v397 = vmul.f32 %v396, %v286
    %v398 = vadd.f32 %v394, %v397
    %v399 = vxor.u32 %v398, 2147483648
    %v400 = vmul.f32 %v399, 1.442695
    %v401 = vpow.pop %v400
    %v402 = vadd.f32 %v401, 1.0
    %v403 = vrcp.pop %v402
    %v404 = vmul.f32 1.0, %v403
    %v405 = vmul.f32 %v282, %v404
    %v407 = vrot.slane %v405, 2
    %v409 = vadd.f32 %v405, %v407
    %v411 = vrot.slane %v404, 2
    %v413 = vadd.f32 %v404, %v411
    %s414 = scalar_lea.vmem [#allocation4], 2
    %v415 = vld [vmem:[%s414] sm:$0x3]
    %v416 = vadd.f32 %v415, %v409
    %417 = vst [vmem:[%s414] sm:$0x3] %v416
    %s418 = scalar_lea.vmem [#allocation5], 2
    %v419 = vld [vmem:[%s418] sm:$0x3]
    %v420 = vadd.f32 %v419, %v413
    %421 = vst [vmem:[%s418] sm:$0x3] %v420
    %s422 = sld [smem:[#allocation6 + $0xe]]
    %v423 = vstv %s422
    %v424 = vmul.f32 %v423, %v339
    %s425 = sld [smem:[#allocation6 + $0xa]]
    %v426 = vstv %s425
    %v427 = vmul.f32 %v426, %v280
    %v428 = vadd.f32 %v424, %v427
    %s429 = sld [smem:[#allocation6 + $0xb]]
    %v430 = vstv %s429
    %v431 = vmul.f32 %v430, %v282
    %v432 = vadd.f32 %v428, %v431
    %s433 = sld [smem:[#allocation6 + $0xc]]
    %v434 = vstv %s433
    %v435 = vmul.f32 %v434, %v284
    %v436 = vadd.f32 %v432, %v435
    %s437 = sld [smem:[#allocation6 + $0xd]]
    %v438 = vstv %s437
    %v439 = vmul.f32 %v438, %v286
    %v440 = vadd.f32 %v436, %v439
    %v441 = vxor.u32 %v440, 2147483648
    %v442 = vmul.f32 %v441, 1.442695
    %v443 = vpow.pop %v442
    %v444 = vadd.f32 %v443, 1.0
    %v445 = vrcp.pop %v444
    %v446 = vmul.f32 1.0, %v445
    %v447 = vmul.f32 %v284, %v446
    %v449 = vrot.slane %v447, 2
    %v451 = vadd.f32 %v447, %v449
    %v453 = vrot.slane %v446, 2
    %v455 = vadd.f32 %v446, %v453
    %s456 = scalar_lea.vmem [#allocation4], 4
    %v457 = vld [vmem:[%s456] sm:$0x3]
    %v458 = vadd.f32 %v457, %v451
    %459 = vst [vmem:[%s456] sm:$0x3] %v458
    %s460 = scalar_lea.vmem [#allocation5], 4
    %v461 = vld [vmem:[%s460] sm:$0x3]
    %v462 = vadd.f32 %v461, %v455
    %463 = vst [vmem:[%s460] sm:$0x3] %v462
    %s464 = sld [smem:[#allocation6 + $0x13]]
    %v465 = vstv %s464
    %v466 = vmul.f32 %v465, %v339
    %s467 = sld [smem:[#allocation6 + $0xf]]
    %v468 = vstv %s467
    %v469 = vmul.f32 %v468, %v280
    %v470 = vadd.f32 %v466, %v469
    %s471 = sld [smem:[#allocation6 + $0x10]]
    %v472 = vstv %s471
    %v473 = vmul.f32 %v472, %v282
    %v474 = vadd.f32 %v470, %v473
    %s475 = sld [smem:[#allocation6 + $0x11]]
    %v476 = vstv %s475
    %v477 = vmul.f32 %v476, %v284
    %v478 = vadd.f32 %v474, %v477
    %s479 = sld [smem:[#allocation6 + $0x12]]
    %v480 = vstv %s479
    %v481 = vmul.f32 %v480, %v286
    %v482 = vadd.f32 %v478, %v481
    %v483 = vxor.u32 %v482, 2147483648
    %v484 = vmul.f32 %v483, 1.442695
    %v485 = vpow.pop %v484
    %v486 = vadd.f32 %v485, 1.0
    %v487 = vrcp.pop %v486
    %v488 = vmul.f32 1.0, %v487
    %v489 = vmul.f32 %v286, %v488
    %v491 = vrot.slane %v489, 2
    %v493 = vadd.f32 %v489, %v491
    %v495 = vrot.slane %v488, 2
    %v497 = vadd.f32 %v488, %v495
    %s498 = scalar_lea.vmem [#allocation4], 6
    %v499 = vld [vmem:[%s498] sm:$0x3]
    %v500 = vadd.f32 %v499, %v493
    %501 = vst [vmem:[%s498] sm:$0x3] %v500
    %s502 = scalar_lea.vmem [#allocation5], 6
    %v503 = vld [vmem:[%s502] sm:$0x3]
    %v504 = vadd.f32 %v503, %v497
    %505 = vst [vmem:[%s502] sm:$0x3] %v504
    // Predicated region
    $region30: #{cpdfp_forward.1} parent=1 // pred_check
      %p506 = pneg %p34
    $region31: #{cpdfp_forward.1} parent=1 // pred_check_branch
      %508 = sbr.rel (%p506) target = $region33
    $region32: #{cpdfp_forward.1} parent=1 // pred_region
      %v509 = vld [vmem:[#allocation2] sm:$0x3]
      %vm510 = vcmask 1041408
      %v511 = vsel %vm510, %v509, 0.0
      %512 = vadd.xlane.f32.xlu0 %v511
      %v513 = vpop.xlane.xlu0 %512
      %v514 = vld [vmem:[#allocation3] sm:$0x3]
      %v515 = vsel %vm510, %v514, 0.0
      %516 = vadd.xlane.f32.xlu0 %v515
      %v517 = vpop.xlane.xlu0 %516
      %v518 = vadd.f32 %v517, 1e-08
      %v519 = vrcp.pop %v518
      %v520 = vmul.f32 %v513, %v519
      %v521 = vld [vmem:[#allocation4] sm:$0x3]
      %v522 = vsel %vm510, %v521, 0.0
      %523 = vadd.xlane.f32.xlu0 %v522
      %v524 = vpop.xlane.xlu0 %523
      %v525 = vld [vmem:[#allocation5] sm:$0x3]
      %v526 = vsel %vm510, %v525, 0.0
      %527 = vadd.xlane.f32.xlu0 %v526
      %v528 = vpop.xlane.xlu0 %527
      %v529 = vadd.f32 %v528, 1e-08
      %v530 = vrcp.pop %v529
      %v531 = vmul.f32 %v524, %v530
      %v532 = vadd.f32 %v520, %v531
      %vm533 = vcmask 1024
      %534 = vst.msk [vmem:[#allocation9] sm:$0x3] %vm533, %v532
      %v535 = vld [vmem:[%s188] sm:$0x3]
      %v536 = vsel %vm510, %v535, 0.0
      %537 = vadd.xlane.f32.xlu0 %v536
      %v538 = vpop.xlane.xlu0 %537
      %v539 = vld [vmem:[%s192] sm:$0x3]
      %v540 = vsel %vm510, %v539, 0.0
      %541 = vadd.xlane.f32.xlu0 %v540
      %v542 = vpop.xlane.xlu0 %541
      %v543 = vadd.f32 %v542, 1e-08
      %v544 = vrcp.pop %v543
      %v545 = vmul.f32 %v538, %v544
      %v546 = vld [vmem:[%s414] sm:$0x3]
      %v547 = vsel %vm510, %v546, 0.0
      %548 = vadd.xlane.f32.xlu0 %v547
      %v549 = vpop.xlane.xlu0 %548
      %v550 = vld [vmem:[%s418] sm:$0x3]
      %v551 = vsel %vm510, %v550, 0.0
      %552 = vadd.xlane.f32.xlu0 %v551
      %v553 = vpop.xlane.xlu0 %552
      %v554 = vadd.f32 %v553, 1e-08
      %v555 = vrcp.pop %v554
      %v556 = vmul.f32 %v549, %v555
      %v557 = vadd.f32 %v545, %v556
      %vm558 = vcmask 9224
      %559 = vst.msk [vmem:[#allocation9] sm:$0x3] %vm558, %v557
      %v560 = vld [vmem:[%s230] sm:$0x3]
      %v561 = vsel %vm510, %v560, 0.0
      %562 = vadd.xlane.f32.xlu0 %v561
      %v563 = vpop.xlane.xlu0 %562
      %v564 = vld [vmem:[%s234] sm:$0x3]
      %v565 = vsel %vm510, %v564, 0.0
      %566 = vadd.xlane.f32.xlu0 %v565
      %v567 = vpop.xlane.xlu0 %566
      %v568 = vadd.f32 %v567, 1e-08
      %v569 = vrcp.pop %v568
      %v570 = vmul.f32 %v563, %v569
      %v571 = vld [vmem:[%s456] sm:$0x3]
      %v572 = vsel %vm510, %v571, 0.0
      %573 = vadd.xlane.f32.xlu0 %v572
      %v574 = vpop.xlane.xlu0 %573
      %v575 = vld [vmem:[%s460] sm:$0x3]
      %v576 = vsel %vm510, %v575, 0.0
      %577 = vadd.xlane.f32.xlu0 %v576
      %v578 = vpop.xlane.xlu0 %577
      %v579 = vadd.f32 %v578, 1e-08
      %v580 = vrcp.pop %v579
      %v581 = vmul.f32 %v574, %v580
      %v582 = vadd.f32 %v570, %v581
      %vm583 = vcmask 17424
      %584 = vst.msk [vmem:[#allocation9] sm:$0x3] %vm583, %v582
      %v585 = vld [vmem:[%s272] sm:$0x3]
      %v586 = vsel %vm510, %v585, 0.0
      %587 = vadd.xlane.f32.xlu0 %v586
      %v588 = vpop.xlane.xlu0 %587
      %v589 = vld [vmem:[%s276] sm:$0x3]
      %v590 = vsel %vm510, %v589, 0.0
      %591 = vadd.xlane.f32.xlu0 %v590
      %v592 = vpop.xlane.xlu0 %591
      %v593 = vadd.f32 %v592, 1e-08
      %v594 = vrcp.pop %v593
      %v595 = vmul.f32 %v588, %v594
      %v596 = vld [vmem:[%s498] sm:$0x3]
      %v597 = vsel %vm510, %v596, 0.0
      %598 = vadd.xlane.f32.xlu0 %v597
      %v599 = vpop.xlane.xlu0 %598
      %v600 = vld [vmem:[%s502] sm:$0x3]
      %v601 = vsel %vm510, %v600, 0.0
      %602 = vadd.xlane.f32.xlu0 %v601
      %v603 = vpop.xlane.xlu0 %602
      %v604 = vadd.f32 %v603, 1e-08
      %v605 = vrcp.pop %v604
      %v606 = vmul.f32 %v599, %v605
      %v607 = vadd.f32 %v595, %v606
      %vm608 = vcmask 25624
      %609 = vst.msk [vmem:[#allocation9] sm:$0x3] %vm608, %v607
    $region33: #{cpdfp_forward.1} parent=1 // pred_fallthru
      _
    // Predicated region
    $region34: #{cpdfp_forward.1} parent=1 // pred_check
      _
    $region35: #{cpdfp_forward.1} parent=1 // pred_check_branch
      %611 = sbr.rel (0) target = $region37
    $region36: #{cpdfp_forward.1} parent=1 // pred_region
      %s613 = ssub.s32 32, 32
      %614 = vsyncadd [#allocation7], %s613
      %s616 = sshll.u32 [#allocation9], 4
      %s617 = int_to_ptr.vmem [resolvable:$true] %s616
      %619 = dma.vmem_to_hbm [thread:$0]  %s617, 32, %s5, [#allocation7]
    $region37: #{cpdfp_forward.1} parent=1 // pred_fallthru
      _
    // Predicated region
    $region38: #{cpdfp_forward.1} parent=1 // pred_check
      _
    $region39: #{cpdfp_forward.1} parent=1 // pred_check_branch
      %621 = sbr.rel (0) target = $region41
    $region40: #{cpdfp_forward.1} parent=1 // pred_region
      %622 = dma.done [#allocation7], 32
    $region41: #{cpdfp_forward.1} parent=1 // pred_fallthru
      _
    %623 = vsyncpa [#allocation7], 1
    %624 = vsyncpa [#allocation8], 1

</llo_original>
